<compile_context>
chip_gen: v6e
topology: v6e:2x2x1
jax: 0.10.0
libtpu: 0.0.40
codegen_flags: <defaults>
</compile_context>

<pallas_src>
import jax
import jax.numpy as jnp
from jax.experimental import pallas as pl
from jax.experimental.pallas import tpu as pltpu

INPUT_DIM = 6
HIDDEN_DIM = 128
OUTPUT_DIM = 256
GRAV_HID = 32
MOTION_HID = 64
MOTION_CLASSES = 4
AUX_COLS = 128           # lane-dense aux output width (gravity + motion packed)

# ---- packed "small parameter" slab layout (f32, width 256, rows mult of 8) ----
SLAB_COLS = 256
ROW_LN_G, ROW_LN_B = 0, 1
ROW_GB1, ROW_GB2, ROW_GB3 = 2, 3, 4
ROW_C1B, ROW_C2B = 5, 6
ROW_F1B, ROW_F2B, ROW_F3B = 7, 8, 9
ROW_RPB, ROW_MB1, ROW_MB2 = 10, 11, 12
ROW_GW1 = 16             # (3, 32)
ROW_GW2 = 24             # (32, 32)
ROW_GW3 = 56             # (32, 3)
ROW_MW2 = 88             # (64, 4)
SLAB_ROWS = 152

PARAM_ORDER = [
    "gw1", "gb1", "gw2", "gb2", "gw3", "gb3",      # gravity estimator MLP
    "ln_g", "ln_b",                                # input LayerNorm(6)
    "c1w", "c1b", "c2w", "c2b",                    # temporal convs (k=3, pad=1)
    "f1w", "f1b", "f2w", "f2b", "f3w", "f3b",      # feature extractor MLP
    "rpw", "rpb",                                  # residual projection 6->256
    "mw1", "mb1", "mw2", "mb2",                    # motion classifier
]


def init_params(key):
    """Deterministic synthetic parameter init (shapes match the nn.Module)."""
    shapes = {
        "gw1": (3, GRAV_HID), "gb1": (1, GRAV_HID),
        "gw2": (GRAV_HID, GRAV_HID), "gb2": (1, GRAV_HID),
        "gw3": (GRAV_HID, 3), "gb3": (1, 3),
        "ln_g": (1, INPUT_DIM), "ln_b": (1, INPUT_DIM),
        "c1w": (3, INPUT_DIM, HIDDEN_DIM), "c1b": (1, HIDDEN_DIM),
        "c2w": (3, HIDDEN_DIM, HIDDEN_DIM), "c2b": (1, HIDDEN_DIM),
        "f1w": (HIDDEN_DIM, HIDDEN_DIM), "f1b": (1, HIDDEN_DIM),
        "f2w": (HIDDEN_DIM, HIDDEN_DIM), "f2b": (1, HIDDEN_DIM),
        "f3w": (HIDDEN_DIM, OUTPUT_DIM), "f3b": (1, OUTPUT_DIM),
        "rpw": (INPUT_DIM, OUTPUT_DIM), "rpb": (1, OUTPUT_DIM),
        "mw1": (OUTPUT_DIM, MOTION_HID), "mb1": (1, MOTION_HID),
        "mw2": (MOTION_HID, MOTION_CLASSES), "mb2": (1, MOTION_CLASSES),
    }
    keys = jax.random.split(key, len(PARAM_ORDER))
    params = {}
    for name, k in zip(PARAM_ORDER, keys):
        scale = 0.01 if name.endswith("b") and name != "ln_b" else 0.05
        params[name] = jax.random.normal(k, shapes[name], jnp.float32) * scale
    params["ln_g"] = 1.0 + 0.1 * jax.random.normal(keys[6], shapes["ln_g"], jnp.float32)
    params["ln_b"] = 0.05 * jax.random.normal(keys[7], shapes["ln_b"], jnp.float32)
    return params


def _pack_small_params(p):
    """Pack all tiny parameters into a single lane-dense (152, 256) f32 slab."""
    slab = jnp.zeros((SLAB_ROWS, SLAB_COLS), jnp.float32)

    def put(s, row, arr):
        arr = jnp.asarray(arr, jnp.float32)
        if arr.ndim == 1:
            arr = arr[None, :]
        return s.at[row:row + arr.shape[0], 0:arr.shape[1]].set(arr)

    slab = put(slab, ROW_LN_G, p["ln_g"])
    slab = put(slab, ROW_LN_B, p["ln_b"])
    slab = put(slab, ROW_GB1, p["gb1"])
    slab = put(slab, ROW_GB2, p["gb2"])
    slab = put(slab, ROW_GB3, p["gb3"])
    slab = put(slab, ROW_C1B, p["c1b"])
    slab = put(slab, ROW_C2B, p["c2b"])
    slab = put(slab, ROW_F1B, p["f1b"])
    slab = put(slab, ROW_F2B, p["f2b"])
    slab = put(slab, ROW_F3B, p["f3b"])
    slab = put(slab, ROW_RPB, p["rpb"])
    slab = put(slab, ROW_MB1, p["mb1"])
    slab = put(slab, ROW_MB2, p["mb2"])
    slab = put(slab, ROW_GW1, p["gw1"])
    slab = put(slab, ROW_GW2, p["gw2"])
    slab = put(slab, ROW_GW3, p["gw3"])
    slab = put(slab, ROW_MW2, p["mw2"])
    return slab


def imu_kernel(imu_ref, slab_ref, c1w_ref, c2w_ref, f1w_ref, f2w_ref,
               f3w_ref, rpw_ref, mw1_ref, feat_ref, aux_ref):
    M = imu_ref.shape[0]          # TB * S flattened rows in this tile
    TB = aux_ref.shape[0]         # sequences per tile
    S = M // TB                   # timesteps per sequence (static)
    seq_aligned = (S % 8 == 0)    # static: sequences map 1:1 onto sublane tiles

    x = imu_ref[...]              # (M, 6)

    # ---- small params: direct static Ref slices (free views, no slab copy) ----
    ln_g = slab_ref[ROW_LN_G:ROW_LN_G + 1, 0:INPUT_DIM]
    ln_b = slab_ref[ROW_LN_B:ROW_LN_B + 1, 0:INPUT_DIM]
    gb1 = slab_ref[ROW_GB1:ROW_GB1 + 1, 0:GRAV_HID]
    gb2 = slab_ref[ROW_GB2:ROW_GB2 + 1, 0:GRAV_HID]
    gb3 = slab_ref[ROW_GB3:ROW_GB3 + 1, 0:3]
    c1b = slab_ref[ROW_C1B:ROW_C1B + 1, 0:HIDDEN_DIM]
    c2b = slab_ref[ROW_C2B:ROW_C2B + 1, 0:HIDDEN_DIM]
    f1b = slab_ref[ROW_F1B:ROW_F1B + 1, 0:HIDDEN_DIM]
    f2b = slab_ref[ROW_F2B:ROW_F2B + 1, 0:HIDDEN_DIM]
    f3b = slab_ref[ROW_F3B:ROW_F3B + 1, 0:OUTPUT_DIM]
    rpb = slab_ref[ROW_RPB:ROW_RPB + 1, 0:OUTPUT_DIM]
    mb1 = slab_ref[ROW_MB1:ROW_MB1 + 1, 0:MOTION_HID]
    mb2 = slab_ref[ROW_MB2:ROW_MB2 + 1, 0:MOTION_CLASSES]
    gw1 = slab_ref[ROW_GW1:ROW_GW1 + 3, 0:GRAV_HID]
    gw2 = slab_ref[ROW_GW2:ROW_GW2 + GRAV_HID, 0:GRAV_HID]
    gw3 = slab_ref[ROW_GW3:ROW_GW3 + GRAV_HID, 0:3]
    mw2 = slab_ref[ROW_MW2:ROW_MW2 + MOTION_HID, 0:MOTION_CLASSES]

    accel = x[:, 0:3]
    gyro = x[:, 3:INPUT_DIM]

    # ---- per-sequence mean of accel (gravity input) ---------------------------
    if seq_aligned:
        # layout-free reshape + sublane (XLU) reduction — O(M) instead of O(TB*M)
        mean_accel = jnp.mean(x.reshape(TB, S, INPUT_DIM), axis=1)[:, 0:3]   # (TB,3)
    else:
        # fallback (rare): tiny 0/1 pooling matmuls built in-kernel
        seq_of_col = jax.lax.broadcasted_iota(jnp.int32, (TB, M), 1) // S
        b_of_row = jax.lax.broadcasted_iota(jnp.int32, (TB, M), 0)
        pool = jnp.where(seq_of_col == b_of_row, 1.0 / S, 0.0).astype(jnp.float32)
        seq_of_row = jax.lax.broadcasted_iota(jnp.int32, (M, TB), 0) // S
        b_of_col = jax.lax.broadcasted_iota(jnp.int32, (M, TB), 1)
        expand = jnp.where(seq_of_row == b_of_col, 1.0, 0.0).astype(jnp.float32)
        mean_accel = jnp.dot(pool, accel, preferred_element_type=jnp.float32)

    # ---- gravity estimation MLP (batched over the TB sequences) ---------------
    g = jnp.maximum(jnp.dot(mean_accel, gw1,
                            preferred_element_type=jnp.float32) + gb1, 0.0)
    g = jnp.maximum(jnp.dot(g, gw2,
                            preferred_element_type=jnp.float32) + gb2, 0.0)
    gravity = jnp.dot(g, gw3, preferred_element_type=jnp.float32) + gb3          # (TB,3)

    if seq_aligned:
        grav_rows = jnp.broadcast_to(gravity[:, None, :], (TB, S, 3)).reshape(M, 3)
    else:
        grav_rows = jnp.dot(expand, gravity, preferred_element_type=jnp.float32)
    proc = jnp.concatenate([accel - grav_rows, gyro], axis=-1)                   # (M,6)

    # ---- LayerNorm over the channel dim (eps = 1e-5, torch default) -----------
    mu = jnp.mean(proc, axis=-1, keepdims=True)
    var = jnp.mean((proc - mu) ** 2, axis=-1, keepdims=True)
    normed = (proc - mu) * jax.lax.rsqrt(var + 1e-5) * ln_g + ln_b               # (M,6)

    # ---- k=3 / pad=1 temporal convs: one fused (M,3C)@(3C,D) matmul per conv ---
    row = jax.lax.broadcasted_iota(jnp.int32, (M, 1), 0)
    t_in_seq = row % S
    has_prev = t_in_seq != 0
    has_next = t_in_seq != (S - 1)

    def temporal_conv(h, w_ref, bias):
        # out[t] = relu(w0·h[t-1] + w1·h[t] + w2·h[t+1] + b), zero padded ends.
        hp = jnp.where(has_prev, pltpu.roll(h, shift=1, axis=0), 0.0)
        hn = jnp.where(has_next, pltpu.roll(h, shift=M - 1, axis=0), 0.0)
        cat = jnp.concatenate([hp, h, hn], axis=-1)                              # (M,3C)
        out = jnp.dot(cat, w_ref[...], preferred_element_type=jnp.float32) + bias
        return jnp.maximum(out, 0.0)

    h1 = temporal_conv(normed, c1w_ref, c1b)        # (M, 128), K = 18
    h2 = temporal_conv(h1, c2w_ref, c2b)            # (M, 128), K = 384

    # ---- feature extractor MLP (Dropout = identity at inference) --------------
    # Kept in f32: bf16 MXU inputs were suggested but risk the 1e-3 feature
    # tolerance after 5 stacked matmul layers.
    z = jnp.maximum(jnp.dot(h2, f1w_ref[...],
                            preferred_element_type=jnp.float32) + f1b, 0.0)
    z = jnp.maximum(jnp.dot(z, f2w_ref[...],
                            preferred_element_type=jnp.float32) + f2b, 0.0)
    z = jnp.maximum(jnp.dot(z, f3w_ref[...],
                            preferred_element_type=jnp.float32) + f3b, 0.0)      # (M,256)

    # ---- residual projection of the LayerNormed input -------------------------
    feat = z + jnp.dot(normed, rpw_ref[...],
                       preferred_element_type=jnp.float32) + rpb                 # (M,256)
    feat_ref[...] = feat

    # ---- motion classifier on per-sequence mean features ----------------------
    if seq_aligned:
        mf = jnp.mean(feat.reshape(TB, S, OUTPUT_DIM), axis=1)                   # (TB,256)
    else:
        mf = jnp.dot(pool, feat, preferred_element_type=jnp.float32)
    m = jnp.maximum(jnp.dot(mf, mw1_ref[...],
                            preferred_element_type=jnp.float32) + mb1, 0.0)
    logits = jnp.dot(m, mw2, preferred_element_type=jnp.float32) + mb2           # (TB,4)
    logits = logits - jnp.max(logits, axis=-1, keepdims=True)
    e = jnp.exp(logits)
    probs = e * pl.reciprocal(jnp.sum(e, axis=-1, keepdims=True))   # exact divide

    # single lane-dense aux slab: gravity in lanes [0:3], motion probs in [3:7]
    pad = jnp.zeros((TB, AUX_COLS - 3 - MOTION_CLASSES), jnp.float32)
    aux_ref[...] = jnp.concatenate([gravity, probs, pad], axis=-1)


def _choose_batch_tile(B, S, target_rows=2048):
    """Sequences per grid step.

    Aim for ~target_rows flattened rows per step (amortizes the ~0.35 us/step
    pipeline overhead); tiles are multiples of 8 for sublane alignment.  When the
    whole batch fits in one step, still split in two if each half keeps >=1024
    rows, so v7x's two TensorCores both get work via the "parallel" grid axis.
    """
    total = B * S
    if total <= target_rows:
        half = B // 2
        if half >= 8 and half % 8 == 0 and half * S >= 1024:
            return half
        return B
    tb = max(8, (max(1, target_rows // S) // 8) * 8)
    return tb if tb < B else B


def advanced_imu_encoder(imu, params, *, target_rows=2048):
    B, S, C = imu.shape
    assert C == INPUT_DIM

    TB = _choose_batch_tile(B, S, target_rows)
    B_pad = ((B + TB - 1) // TB) * TB
    grid = B_pad // TB
    M = TB * S

    if B_pad != B:
        imu = jnp.concatenate(
            [imu, jnp.zeros((B_pad - B, S, C), imu.dtype)], axis=0)
    imu_flat = imu.astype(jnp.float32).reshape(B_pad * S, C)

    slab = _pack_small_params(params)
    # Conv weights pre-reshaped to (3*C_in, C_out) so each temporal conv is ONE
    # fused MXU matmul over the lane-concatenated [prev, center, next] taps.
    c1w_flat = params["c1w"].reshape(3 * INPUT_DIM, HIDDEN_DIM)
    c2w_flat = params["c2w"].reshape(3 * HIDDEN_DIM, HIDDEN_DIM)
    big = [c1w_flat, c2w_flat, params["f1w"], params["f2w"],
           params["f3w"], params["rpw"], params["mw1"]]

    def full_spec(arr):
        nd = arr.ndim
        # Grid-invariant weights (<1 MiB total).  pipeline_mode=pl.Buffered(1)
        # would halve their VMEM on v7x but the saving is negligible here.
        return pl.BlockSpec(arr.shape, lambda i, _nd=nd: (0,) * _nd)

    in_specs = ([pl.BlockSpec((M, C), lambda i: (i, 0)), full_spec(slab)]
                + [full_spec(w) for w in big])
    out_specs = (pl.BlockSpec((M, OUTPUT_DIM), lambda i: (i, 0)),
                 pl.BlockSpec((TB, AUX_COLS), lambda i: (i, 0)))
    out_shape = (jax.ShapeDtypeStruct((B_pad * S, OUTPUT_DIM), jnp.float32),
                 jax.ShapeDtypeStruct((B_pad, AUX_COLS), jnp.float32))

    feat_flat, aux = pl.pallas_call(
        imu_kernel,
        grid=(grid,),
        in_specs=in_specs,
        out_specs=out_specs,
        out_shape=out_shape,
        compiler_params=pltpu.CompilerParams(
            dimension_semantics=("parallel",),
            vmem_limit_bytes=48 * 1024 * 1024),
    )(imu_flat, slab, *big)

    feats = feat_flat.reshape(B_pad, S, OUTPUT_DIM)[:B]
    return {
        "features": feats,
        "raw_features": feats,
        "gravity_estimate": aux[:B, 0:3],
        "motion_class": aux[:B, 3:3 + MOTION_CLASSES],
    }


def ref_forward(imu, p):
    """Pure-JAX reference matching the PyTorch forward (eval mode)."""
    S = imu.shape[1]
    accel, gyro = imu[:, :, :3], imu[:, :, 3:]
    mean_accel = jnp.mean(accel, axis=1)
    h = jax.nn.relu(mean_accel @ p["gw1"] + p["gb1"])
    h = jax.nn.relu(h @ p["gw2"] + p["gb2"])
    gravity = h @ p["gw3"] + p["gb3"]
    proc = jnp.concatenate([accel - gravity[:, None, :], gyro], axis=-1)
    mu = proc.mean(-1, keepdims=True)
    var = ((proc - mu) ** 2).mean(-1, keepdims=True)
    normed = (proc - mu) / jnp.sqrt(var + 1e-5) * p["ln_g"] + p["ln_b"]
    pad1 = jnp.pad(normed, ((0, 0), (1, 1), (0, 0)))
    h1 = sum(jnp.einsum("bsc,cd->bsd", pad1[:, k:k + S], p["c1w"][k]) for k in range(3))
    h1 = jax.nn.relu(h1 + p["c1b"])
    pad2 = jnp.pad(h1, ((0, 0), (1, 1), (0, 0)))
    h2 = sum(jnp.einsum("bsc,cd->bsd", pad2[:, k:k + S], p["c2w"][k]) for k in range(3))
    h2 = jax.nn.relu(h2 + p["c2b"])
    z = jax.nn.relu(h2 @ p["f1w"] + p["f1b"])
    z = jax.nn.relu(z @ p["f2w"] + p["f2b"])
    z = jax.nn.relu(z @ p["f3w"] + p["f3b"])
    feat = z + (normed @ p["rpw"] + p["rpb"])
    mf = feat.mean(axis=1)
    m = jax.nn.relu(mf @ p["mw1"] + p["mb1"])
    motion = jax.nn.softmax(m @ p["mw2"] + p["mb2"], axis=-1)
    return feat, gravity, motion


def _check(out, ref, tag):
    ref_feat, ref_grav, ref_motion = ref
    assert jnp.allclose(out["features"], ref_feat, rtol=1e-3, atol=1e-3), tag
    assert jnp.allclose(out["gravity_estimate"], ref_grav, rtol=1e-3, atol=1e-3), tag
    assert jnp.allclose(out["motion_class"], ref_motion, rtol=1e-3, atol=1e-3), tag


if __name__ == "__main__":
    key = jax.random.PRNGKey(0)
    k1, k2, k3, k4, kp = jax.random.split(key, 5)
    params = init_params(kp)

    # 1) small-shape check (single grid step, block == full arrays)
    imu = jax.random.normal(k1, (2, 8, INPUT_DIM), jnp.float32)
    out = advanced_imu_encoder(imu, params)
    jax.block_until_ready(out)
    _check(out, ref_forward(imu, params), "small")

    # 2) medium batch: one big flattened step (M = 1024 rows)
    imu2 = jax.random.normal(k2, (128, 8, INPUT_DIM), jnp.float32)
    out2 = advanced_imu_encoder(imu2, params)
    jax.block_until_ready(out2)
    _check(out2, ref_forward(imu2, params), "medium")

    # 3) large batch: multi-step grid (TB=256 -> M=2048/step) + batch padding
    imu3 = jax.random.normal(k3, (600, 8, INPUT_DIM), jnp.float32)
    out3 = advanced_imu_encoder(imu3, params)
    jax.block_until_ready(out3)
    _check(out3, ref_forward(imu3, params), "large")

    # 4) non-sublane-aligned sequence length -> exercises the matmul-pool fallback
    imu4 = jax.random.normal(k4, (16, 12, INPUT_DIM), jnp.float32)
    out4 = advanced_imu_encoder(imu4, params)
    jax.block_until_ready(out4)
    _check(out4, ref_forward(imu4, params), "odd_seq")

    print("KERNEL_OK")
</pallas_src>

<mosaic_0001>
module attributes {stable_mosaic.version = 11 : i64} {
  func.func @imu_kernel(%arg0: i32, %arg1: memref<16x6xf32, #tpu.memory_space<vmem>>, %arg2: memref<152x256xf32, #tpu.memory_space<vmem>>, %arg3: memref<18x128xf32, #tpu.memory_space<vmem>>, %arg4: memref<384x128xf32, #tpu.memory_space<vmem>>, %arg5: memref<128x128xf32, #tpu.memory_space<vmem>>, %arg6: memref<128x128xf32, #tpu.memory_space<vmem>>, %arg7: memref<128x256xf32, #tpu.memory_space<vmem>>, %arg8: memref<6x256xf32, #tpu.memory_space<vmem>>, %arg9: memref<256x64xf32, #tpu.memory_space<vmem>>, %arg10: memref<16x256xf32, #tpu.memory_space<vmem>>, %arg11: memref<2x128xf32, #tpu.memory_space<vmem>>) attributes {dimension_semantics = [#tpu.dimension_semantics<parallel>], iteration_bounds = array<i64: 1>, scalar_prefetch = 0 : i64, scratch_operands = 0 : i64, tpu.core_type = #tpu.core_type<tc>, window_params = [{transform_indices = @transform_0, window_bounds = array<i64: 16, 6>}, {pipeline_mode = #tpu.pipeline_mode<synchronous>, transform_indices = @transform_1, window_bounds = array<i64: 152, 256>}, {pipeline_mode = #tpu.pipeline_mode<synchronous>, transform_indices = @transform_2, window_bounds = array<i64: 18, 128>}, {pipeline_mode = #tpu.pipeline_mode<synchronous>, transform_indices = @transform_3, window_bounds = array<i64: 384, 128>}, {pipeline_mode = #tpu.pipeline_mode<synchronous>, transform_indices = @transform_4, window_bounds = array<i64: 128, 128>}, {pipeline_mode = #tpu.pipeline_mode<synchronous>, transform_indices = @transform_5, window_bounds = array<i64: 128, 128>}, {pipeline_mode = #tpu.pipeline_mode<synchronous>, transform_indices = @transform_6, window_bounds = array<i64: 128, 256>}, {pipeline_mode = #tpu.pipeline_mode<synchronous>, transform_indices = @transform_7, window_bounds = array<i64: 6, 256>}, {pipeline_mode = #tpu.pipeline_mode<synchronous>, transform_indices = @transform_8, window_bounds = array<i64: 256, 64>}, {transform_indices = @transform_9, window_bounds = array<i64: 16, 256>}, {transform_indices = @transform_10, window_bounds = array<i64: 2, 128>}]} {
    %c0 = arith.constant 0 : index
    %c0_0 = arith.constant 0 : index
    %0 = vector.load %arg1[%c0, %c0_0] : memref<16x6xf32, #tpu.memory_space<vmem>>, vector<16x6xf32>
    %c0_1 = arith.constant 0 : index
    %c0_2 = arith.constant 0 : index
    %1 = vector.load %arg2[%c0_1, %c0_2] : memref<152x256xf32, #tpu.memory_space<vmem>>, vector<1x6xf32>
    %c1 = arith.constant 1 : index
    %c0_3 = arith.constant 0 : index
    %2 = vector.load %arg2[%c1, %c0_3] : memref<152x256xf32, #tpu.memory_space<vmem>>, vector<1x6xf32>
    %c2 = arith.constant 2 : index
    %c0_4 = arith.constant 0 : index
    %3 = vector.load %arg2[%c2, %c0_4] : memref<152x256xf32, #tpu.memory_space<vmem>>, vector<1x32xf32>
    %c3 = arith.constant 3 : index
    %c0_5 = arith.constant 0 : index
    %4 = vector.load %arg2[%c3, %c0_5] : memref<152x256xf32, #tpu.memory_space<vmem>>, vector<1x32xf32>
    %c4 = arith.constant 4 : index
    %c0_6 = arith.constant 0 : index
    %5 = vector.load %arg2[%c4, %c0_6] : memref<152x256xf32, #tpu.memory_space<vmem>>, vector<1x3xf32>
    %c5 = arith.constant 5 : index
    %c0_7 = arith.constant 0 : index
    %6 = vector.load %arg2[%c5, %c0_7] : memref<152x256xf32, #tpu.memory_space<vmem>>, vector<1x128xf32>
    %c6 = arith.constant 6 : index
    %c0_8 = arith.constant 0 : index
    %7 = vector.load %arg2[%c6, %c0_8] : memref<152x256xf32, #tpu.memory_space<vmem>>, vector<1x128xf32>
    %c7 = arith.constant 7 : index
    %c0_9 = arith.constant 0 : index
    %8 = vector.load %arg2[%c7, %c0_9] : memref<152x256xf32, #tpu.memory_space<vmem>>, vector<1x128xf32>
    %c8 = arith.constant 8 : index
    %c0_10 = arith.constant 0 : index
    %9 = vector.load %arg2[%c8, %c0_10] : memref<152x256xf32, #tpu.memory_space<vmem>>, vector<1x128xf32>
    %c9 = arith.constant 9 : index
    %c0_11 = arith.constant 0 : index
    %10 = vector.load %arg2[%c9, %c0_11] : memref<152x256xf32, #tpu.memory_space<vmem>>, vector<1x256xf32>
    %c10 = arith.constant 10 : index
    %c0_12 = arith.constant 0 : index
    %11 = vector.load %arg2[%c10, %c0_12] : memref<152x256xf32, #tpu.memory_space<vmem>>, vector<1x256xf32>
    %c11 = arith.constant 11 : index
    %c0_13 = arith.constant 0 : index
    %12 = vector.load %arg2[%c11, %c0_13] : memref<152x256xf32, #tpu.memory_space<vmem>>, vector<1x64xf32>
    %c12 = arith.constant 12 : index
    %c0_14 = arith.constant 0 : index
    %13 = vector.load %arg2[%c12, %c0_14] : memref<152x256xf32, #tpu.memory_space<vmem>>, vector<1x4xf32>
    %c16 = arith.constant 16 : index
    %c0_15 = arith.constant 0 : index
    %14 = vector.load %arg2[%c16, %c0_15] : memref<152x256xf32, #tpu.memory_space<vmem>>, vector<3x32xf32>
    %c24 = arith.constant 24 : index
    %c0_16 = arith.constant 0 : index
    %15 = vector.load %arg2[%c24, %c0_16] : memref<152x256xf32, #tpu.memory_space<vmem>>, vector<32x32xf32>
    %c56 = arith.constant 56 : index
    %c0_17 = arith.constant 0 : index
    %16 = vector.load %arg2[%c56, %c0_17] : memref<152x256xf32, #tpu.memory_space<vmem>>, vector<32x3xf32>
    %c88 = arith.constant 88 : index
    %c0_18 = arith.constant 0 : index
    %17 = vector.load %arg2[%c88, %c0_18] : memref<152x256xf32, #tpu.memory_space<vmem>>, vector<64x4xf32>
    %18 = vector.extract_strided_slice %0 {offsets = [0, 0], sizes = [16, 3], strides = [1, 1]} : vector<16x6xf32> to vector<16x3xf32>
    %19 = vector.extract_strided_slice %0 {offsets = [0, 3], sizes = [16, 3], strides = [1, 1]} : vector<16x6xf32> to vector<16x3xf32>
    %20 = vector.shape_cast %0 : vector<16x6xf32> to vector<2x8x6xf32>
    %cst = arith.constant dense<0.000000e+00> : vector<2x6xf32>
    %21 = vector.multi_reduction <add>, %20, %cst [1] : vector<2x8x6xf32> to vector<2x6xf32>
    %cst_19 = arith.constant 8.000000e+00 : f32
    %22 = vector.broadcast %cst_19 : f32 to vector<2x6xf32>
    %23 = arith.divf %21, %22 : vector<2x6xf32>
    %24 = vector.extract_strided_slice %23 {offsets = [0, 0], sizes = [2, 3], strides = [1, 1]} : vector<2x6xf32> to vector<2x3xf32>
    %cst_20 = arith.constant dense<0.000000e+00> : vector<2x32xf32>
    %25 = tpu.matmul %24, %14, %cst_20 {dimension_numbers = #tpu.dot_dimension_numbers<[1], [0], [0], [1], [0, 0, 1, 1], [], []>} : vector<2x3xf32>, vector<3x32xf32>, vector<2x32xf32> -> vector<2x32xf32>
    %26 = vector.broadcast %3 : vector<1x32xf32> to vector<2x32xf32>
    %27 = arith.addf %25, %26 : vector<2x32xf32>
    %cst_21 = arith.constant 0.000000e+00 : f32
    %28 = vector.broadcast %cst_21 : f32 to vector<2x32xf32>
    %29 = arith.maximumf %27, %28 : vector<2x32xf32>
    %cst_22 = arith.constant dense<0.000000e+00> : vector<2x32xf32>
    %30 = tpu.matmul %29, %15, %cst_22 {dimension_numbers = #tpu.dot_dimension_numbers<[1], [0], [0], [1], [0, 0, 1, 1], [], []>} : vector<2x32xf32>, vector<32x32xf32>, vector<2x32xf32> -> vector<2x32xf32>
    %31 = vector.broadcast %4 : vector<1x32xf32> to vector<2x32xf32>
    %32 = arith.addf %30, %31 : vector<2x32xf32>
    %cst_23 = arith.constant 0.000000e+00 : f32
    %33 = vector.broadcast %cst_23 : f32 to vector<2x32xf32>
    %34 = arith.maximumf %32, %33 : vector<2x32xf32>
    %cst_24 = arith.constant dense<0.000000e+00> : vector<2x3xf32>
    %35 = tpu.matmul %34, %16, %cst_24 {dimension_numbers = #tpu.dot_dimension_numbers<[1], [0], [0], [1], [0, 0, 1, 1], [], []>} : vector<2x32xf32>, vector<32x3xf32>, vector<2x3xf32> -> vector<2x3xf32>
    %36 = vector.broadcast %5 : vector<1x3xf32> to vector<2x3xf32>
    %37 = arith.addf %35, %36 : vector<2x3xf32>
    %38 = vector.shape_cast %37 : vector<2x3xf32> to vector<2x1x3xf32>
    %39 = vector.shape_cast %38 : vector<2x1x3xf32> to vector<2x1x3xf32>
    %40 = vector.broadcast %39 : vector<2x1x3xf32> to vector<2x8x3xf32>
    %41 = vector.shape_cast %40 : vector<2x8x3xf32> to vector<16x3xf32>
    %42 = arith.subf %18, %41 : vector<16x3xf32>
    %43 = tpu.concatenate %42, %19 in 1 : vector<16x3xf32>, vector<16x3xf32> -> vector<16x6xf32>
    %cst_25 = arith.constant dense<0.000000e+00> : vector<16xf32>
    %44 = vector.multi_reduction <add>, %43, %cst_25 [1] : vector<16x6xf32> to vector<16xf32>
    %45 = vector.shape_cast %44 : vector<16xf32> to vector<16x1xf32>
    %cst_26 = arith.constant 6.000000e+00 : f32
    %46 = vector.broadcast %cst_26 : f32 to vector<16x1xf32>
    %47 = arith.divf %45, %46 : vector<16x1xf32>
    %48 = vector.broadcast %47 : vector<16x1xf32> to vector<16x6xf32>
    %49 = arith.subf %43, %48 : vector<16x6xf32>
    %50 = arith.mulf %49, %49 : vector<16x6xf32>
    %cst_27 = arith.constant dense<0.000000e+00> : vector<16xf32>
    %51 = vector.multi_reduction <add>, %50, %cst_27 [1] : vector<16x6xf32> to vector<16xf32>
    %52 = vector.shape_cast %51 : vector<16xf32> to vector<16x1xf32>
    %cst_28 = arith.constant 6.000000e+00 : f32
    %53 = vector.broadcast %cst_28 : f32 to vector<16x1xf32>
    %54 = arith.divf %52, %53 : vector<16x1xf32>
    %55 = vector.broadcast %47 : vector<16x1xf32> to vector<16x6xf32>
    %56 = arith.subf %43, %55 : vector<16x6xf32>
    %cst_29 = arith.constant 9.99999974E-6 : f32
    %57 = vector.broadcast %cst_29 : f32 to vector<16x1xf32>
    %58 = arith.addf %54, %57 : vector<16x1xf32>
    %59 = math.rsqrt %58 : vector<16x1xf32>
    %60 = vector.broadcast %59 : vector<16x1xf32> to vector<16x6xf32>
    %61 = arith.mulf %56, %60 : vector<16x6xf32>
    %62 = vector.broadcast %1 : vector<1x6xf32> to vector<16x6xf32>
    %63 = arith.mulf %61, %62 : vector<16x6xf32>
    %64 = vector.broadcast %2 : vector<1x6xf32> to vector<16x6xf32>
    %65 = arith.addf %63, %64 : vector<16x6xf32>
    %66 = tpu.iota {dimensions = array<i32: 0>} : vector<16x1xi32>
    %c8_i32 = arith.constant 8 : i32
    %c0_i32 = arith.constant 0 : i32
    %67 = arith.cmpi eq, %c8_i32, %c0_i32 : i32
    %c1_i32 = arith.constant 1 : i32
    %68 = arith.select %67, %c1_i32, %c8_i32 : i32
    %69 = vector.broadcast %68 : i32 to vector<16x1xi32>
    %70 = arith.remsi %66, %69 : vector<16x1xi32>
    %c0_i32_30 = arith.constant 0 : i32
    %71 = vector.broadcast %c0_i32_30 : i32 to vector<16x1xi32>
    %72 = arith.cmpi ne, %70, %71 : vector<16x1xi32>
    %c0_i32_31 = arith.constant 0 : i32
    %73 = vector.broadcast %c0_i32_31 : i32 to vector<16x1xi32>
    %74 = arith.cmpi slt, %70, %73 : vector<16x1xi32>
    %c0_i32_32 = arith.constant 0 : i32
    %75 = arith.cmpi slt, %68, %c0_i32_32 : i32
    %76 = vector.broadcast %75 : i1 to vector<16x1xi1>
    %77 = vector.broadcast %76 : vector<16x1xi1> to vector<16x1xi1>
    %78 = arith.xori %74, %77 : vector<16x1xi1>
    %79 = arith.andi %78, %72 : vector<16x1xi1>
    %80 = vector.broadcast %68 : i32 to vector<16x1xi32>
    %81 = arith.addi %70, %80 : vector<16x1xi32>
    %82 = arith.select %79, %81, %70 : vector<16x1xi1>, vector<16x1xi32>
    %c0_i32_33 = arith.constant 0 : i32
    %83 = vector.broadcast %c0_i32_33 : i32 to vector<16x1xi32>
    %84 = arith.cmpi ne, %82, %83 : vector<16x1xi32>
    %c7_i32 = arith.constant 7 : i32
    %85 = vector.broadcast %c7_i32 : i32 to vector<16x1xi32>
    %86 = arith.cmpi ne, %82, %85 : vector<16x1xi32>
    %c1_i32_34 = arith.constant 1 : i32
    %87 = tpu.dynamic_rotate %65 by %c1_i32_34 dim 0 : vector<16x6xf32>, i32 -> vector<16x6xf32>
    %cst_35 = arith.constant 0.000000e+00 : f32
    %88 = vector.shape_cast %84 : vector<16x1xi1> to vector<16x1xi1>
    %89 = vector.broadcast %88 : vector<16x1xi1> to vector<16x6xi1>
    %90 = vector.broadcast %cst_35 : f32 to vector<16x6xf32>
    %91 = arith.select %89, %87, %90 : vector<16x6xi1>, vector<16x6xf32>
    %c15_i32 = arith.constant 15 : i32
    %92 = tpu.dynamic_rotate %65 by %c15_i32 dim 0 : vector<16x6xf32>, i32 -> vector<16x6xf32>
    %cst_36 = arith.constant 0.000000e+00 : f32
    %93 = vector.shape_cast %86 : vector<16x1xi1> to vector<16x1xi1>
    %94 = vector.broadcast %93 : vector<16x1xi1> to vector<16x6xi1>
    %95 = vector.broadcast %cst_36 : f32 to vector<16x6xf32>
    %96 = arith.select %94, %92, %95 : vector<16x6xi1>, vector<16x6xf32>
    %97 = tpu.concatenate %91, %65, %96 in 1 : vector<16x6xf32>, vector<16x6xf32>, vector<16x6xf32> -> vector<16x18xf32>
    %c0_37 = arith.constant 0 : index
    %c0_38 = arith.constant 0 : index
    %98 = vector.load %arg3[%c0_37, %c0_38] : memref<18x128xf32, #tpu.memory_space<vmem>>, vector<18x128xf32>
    %cst_39 = arith.constant dense<0.000000e+00> : vector<16x128xf32>
    %99 = tpu.matmul %97, %98, %cst_39 {dimension_numbers = #tpu.dot_dimension_numbers<[1], [0], [0], [1], [0, 0, 1, 1], [], []>} : vector<16x18xf32>, vector<18x128xf32>, vector<16x128xf32> -> vector<16x128xf32>
    %100 = vector.broadcast %6 : vector<1x128xf32> to vector<16x128xf32>
    %101 = arith.addf %99, %100 : vector<16x128xf32>
    %cst_40 = arith.constant 0.000000e+00 : f32
    %102 = vector.broadcast %cst_40 : f32 to vector<16x128xf32>
    %103 = arith.maximumf %101, %102 : vector<16x128xf32>
    %c1_i32_41 = arith.constant 1 : i32
    %104 = tpu.dynamic_rotate %103 by %c1_i32_41 dim 0 : vector<16x128xf32>, i32 -> vector<16x128xf32>
    %cst_42 = arith.constant 0.000000e+00 : f32
    %105 = vector.shape_cast %84 : vector<16x1xi1> to vector<16x1xi1>
    %106 = vector.broadcast %105 : vector<16x1xi1> to vector<16x128xi1>
    %107 = vector.broadcast %cst_42 : f32 to vector<16x128xf32>
    %108 = arith.select %106, %104, %107 : vector<16x128xi1>, vector<16x128xf32>
    %c15_i32_43 = arith.constant 15 : i32
    %109 = tpu.dynamic_rotate %103 by %c15_i32_43 dim 0 : vector<16x128xf32>, i32 -> vector<16x128xf32>
    %cst_44 = arith.constant 0.000000e+00 : f32
    %110 = vector.shape_cast %86 : vector<16x1xi1> to vector<16x1xi1>
    %111 = vector.broadcast %110 : vector<16x1xi1> to vector<16x128xi1>
    %112 = vector.broadcast %cst_44 : f32 to vector<16x128xf32>
    %113 = arith.select %111, %109, %112 : vector<16x128xi1>, vector<16x128xf32>
    %114 = tpu.concatenate %108, %103, %113 in 1 : vector<16x128xf32>, vector<16x128xf32>, vector<16x128xf32> -> vector<16x384xf32>
    %c0_45 = arith.constant 0 : index
    %c0_46 = arith.constant 0 : index
    %115 = vector.load %arg4[%c0_45, %c0_46] : memref<384x128xf32, #tpu.memory_space<vmem>>, vector<384x128xf32>
    %cst_47 = arith.constant dense<0.000000e+00> : vector<16x128xf32>
    %116 = tpu.matmul %114, %115, %cst_47 {dimension_numbers = #tpu.dot_dimension_numbers<[1], [0], [0], [1], [0, 0, 1, 1], [], []>} : vector<16x384xf32>, vector<384x128xf32>, vector<16x128xf32> -> vector<16x128xf32>
    %117 = vector.broadcast %7 : vector<1x128xf32> to vector<16x128xf32>
    %118 = arith.addf %116, %117 : vector<16x128xf32>
    %cst_48 = arith.constant 0.000000e+00 : f32
    %119 = vector.broadcast %cst_48 : f32 to vector<16x128xf32>
    %120 = arith.maximumf %118, %119 : vector<16x128xf32>
    %c0_49 = arith.constant 0 : index
    %c0_50 = arith.constant 0 : index
    %121 = vector.load %arg5[%c0_49, %c0_50] : memref<128x128xf32, #tpu.memory_space<vmem>>, vector<128x128xf32>
    %cst_51 = arith.constant dense<0.000000e+00> : vector<16x128xf32>
    %122 = tpu.matmul %120, %121, %cst_51 {dimension_numbers = #tpu.dot_dimension_numbers<[1], [0], [0], [1], [0, 0, 1, 1], [], []>} : vector<16x128xf32>, vector<128x128xf32>, vector<16x128xf32> -> vector<16x128xf32>
    %123 = vector.broadcast %8 : vector<1x128xf32> to vector<16x128xf32>
    %124 = arith.addf %122, %123 : vector<16x128xf32>
    %cst_52 = arith.constant 0.000000e+00 : f32
    %125 = vector.broadcast %cst_52 : f32 to vector<16x128xf32>
    %126 = arith.maximumf %124, %125 : vector<16x128xf32>
    %c0_53 = arith.constant 0 : index
    %c0_54 = arith.constant 0 : index
    %127 = vector.load %arg6[%c0_53, %c0_54] : memref<128x128xf32, #tpu.memory_space<vmem>>, vector<128x128xf32>
    %cst_55 = arith.constant dense<0.000000e+00> : vector<16x128xf32>
    %128 = tpu.matmul %126, %127, %cst_55 {dimension_numbers = #tpu.dot_dimension_numbers<[1], [0], [0], [1], [0, 0, 1, 1], [], []>} : vector<16x128xf32>, vector<128x128xf32>, vector<16x128xf32> -> vector<16x128xf32>
    %129 = vector.broadcast %9 : vector<1x128xf32> to vector<16x128xf32>
    %130 = arith.addf %128, %129 : vector<16x128xf32>
    %cst_56 = arith.constant 0.000000e+00 : f32
    %131 = vector.broadcast %cst_56 : f32 to vector<16x128xf32>
    %132 = arith.maximumf %130, %131 : vector<16x128xf32>
    %c0_57 = arith.constant 0 : index
    %c0_58 = arith.constant 0 : index
    %133 = vector.load %arg7[%c0_57, %c0_58] : memref<128x256xf32, #tpu.memory_space<vmem>>, vector<128x256xf32>
    %cst_59 = arith.constant dense<0.000000e+00> : vector<16x256xf32>
    %134 = tpu.matmul %132, %133, %cst_59 {dimension_numbers = #tpu.dot_dimension_numbers<[1], [0], [0], [1], [0, 0, 1, 1], [], []>} : vector<16x128xf32>, vector<128x256xf32>, vector<16x256xf32> -> vector<16x256xf32>
    %135 = vector.broadcast %10 : vector<1x256xf32> to vector<16x256xf32>
    %136 = arith.addf %134, %135 : vector<16x256xf32>
    %cst_60 = arith.constant 0.000000e+00 : f32
    %137 = vector.broadcast %cst_60 : f32 to vector<16x256xf32>
    %138 = arith.maximumf %136, %137 : vector<16x256xf32>
    %c0_61 = arith.constant 0 : index
    %c0_62 = arith.constant 0 : index
    %139 = vector.load %arg8[%c0_61, %c0_62] : memref<6x256xf32, #tpu.memory_space<vmem>>, vector<6x256xf32>
    %cst_63 = arith.constant dense<0.000000e+00> : vector<16x256xf32>
    %140 = tpu.matmul %65, %139, %cst_63 {dimension_numbers = #tpu.dot_dimension_numbers<[1], [0], [0], [1], [0, 0, 1, 1], [], []>} : vector<16x6xf32>, vector<6x256xf32>, vector<16x256xf32> -> vector<16x256xf32>
    %141 = arith.addf %138, %140 : vector<16x256xf32>
    %142 = vector.broadcast %11 : vector<1x256xf32> to vector<16x256xf32>
    %143 = arith.addf %141, %142 : vector<16x256xf32>
    %c0_64 = arith.constant 0 : index
    %c0_65 = arith.constant 0 : index
    %144 = vector.load %arg10[%c0_64, %c0_65] : memref<16x256xf32, #tpu.memory_space<vmem>>, vector<16x256xf32>
    tpu.vector_store %arg10[%c0_64, %c0_65], %143 {strides = array<i32>} : memref<16x256xf32, #tpu.memory_space<vmem>>, vector<16x256xf32>,
    %145 = vector.shape_cast %143 : vector<16x256xf32> to vector<2x8x256xf32>
    %cst_66 = arith.constant dense<0.000000e+00> : vector<2x256xf32>
    %146 = vector.multi_reduction <add>, %145, %cst_66 [1] : vector<2x8x256xf32> to vector<2x256xf32>
    %cst_67 = arith.constant 8.000000e+00 : f32
    %147 = vector.broadcast %cst_67 : f32 to vector<2x256xf32>
    %148 = arith.divf %146, %147 : vector<2x256xf32>
    %c0_68 = arith.constant 0 : index
    %c0_69 = arith.constant 0 : index
    %149 = vector.load %arg9[%c0_68, %c0_69] : memref<256x64xf32, #tpu.memory_space<vmem>>, vector<256x64xf32>
    %cst_70 = arith.constant dense<0.000000e+00> : vector<2x64xf32>
    %150 = tpu.matmul %148, %149, %cst_70 {dimension_numbers = #tpu.dot_dimension_numbers<[1], [0], [0], [1], [0, 0, 1, 1], [], []>} : vector<2x256xf32>, vector<256x64xf32>, vector<2x64xf32> -> vector<2x64xf32>
    %151 = vector.broadcast %12 : vector<1x64xf32> to vector<2x64xf32>
    %152 = arith.addf %150, %151 : vector<2x64xf32>
    %cst_71 = arith.constant 0.000000e+00 : f32
    %153 = vector.broadcast %cst_71 : f32 to vector<2x64xf32>
    %154 = arith.maximumf %152, %153 : vector<2x64xf32>
    %cst_72 = arith.constant dense<0.000000e+00> : vector<2x4xf32>
    %155 = tpu.matmul %154, %17, %cst_72 {dimension_numbers = #tpu.dot_dimension_numbers<[1], [0], [0], [1], [0, 0, 1, 1], [], []>} : vector<2x64xf32>, vector<64x4xf32>, vector<2x4xf32> -> vector<2x4xf32>
    %156 = vector.broadcast %13 : vector<1x4xf32> to vector<2x4xf32>
    %157 = arith.addf %155, %156 : vector<2x4xf32>
    %cst_73 = arith.constant dense<0xFF800000> : vector<2xf32>
    %158 = vector.multi_reduction <maximumf>, %157, %cst_73 [1] : vector<2x4xf32> to vector<2xf32>
    %159 = vector.shape_cast %158 : vector<2xf32> to vector<2x1xf32>
    %160 = vector.broadcast %159 : vector<2x1xf32> to vector<2x4xf32>
    %161 = arith.subf %157, %160 : vector<2x4xf32>
    %162 = math.exp %161 : vector<2x4xf32>
    %cst_74 = arith.constant dense<0.000000e+00> : vector<2xf32>
    %163 = vector.multi_reduction <add>, %162, %cst_74 [1] : vector<2x4xf32> to vector<2xf32>
    %164 = vector.shape_cast %163 : vector<2xf32> to vector<2x1xf32>
    %165 = tpu.reciprocal %164 : vector<2x1xf32> -> vector<2x1xf32>
    %166 = vector.broadcast %165 : vector<2x1xf32> to vector<2x4xf32>
    %167 = arith.mulf %162, %166 : vector<2x4xf32>
    %cst_75 = arith.constant 0.000000e+00 : f32
    %168 = vector.broadcast %cst_75 : f32 to vector<2x121xf32>
    %169 = tpu.concatenate %37, %167, %168 in 1 : vector<2x3xf32>, vector<2x4xf32>, vector<2x121xf32> -> vector<2x128xf32>
    %c0_76 = arith.constant 0 : index
    %c0_77 = arith.constant 0 : index
    %170 = vector.load %arg11[%c0_76, %c0_77] : memref<2x128xf32, #tpu.memory_space<vmem>>, vector<2x128xf32>
    tpu.vector_store %arg11[%c0_76, %c0_77], %169 {strides = array<i32>} : memref<2x128xf32, #tpu.memory_space<vmem>>, vector<2x128xf32>,
    return
  }
  func.func @transform_0(%arg0: i32) -> (i32, i32) {
    %c0_i32 = arith.constant 0 : i32
    %c0_i32_0 = arith.constant 0 : i32
    return %arg0, %c0_i32 : i32, i32
  }
  func.func @transform_1(%arg0: i32) -> (i32, i32) {
    %c0_i32 = arith.constant 0 : i32
    %c0_i32_0 = arith.constant 0 : i32
    %c0_i32_1 = arith.constant 0 : i32
    return %c0_i32, %c0_i32_0 : i32, i32
  }
  func.func @transform_2(%arg0: i32) -> (i32, i32) {
    %c0_i32 = arith.constant 0 : i32
    %c0_i32_0 = arith.constant 0 : i32
    %c0_i32_1 = arith.constant 0 : i32
    return %c0_i32, %c0_i32_0 : i32, i32
  }
  func.func @transform_3(%arg0: i32) -> (i32, i32) {
    %c0_i32 = arith.constant 0 : i32
    %c0_i32_0 = arith.constant 0 : i32
    %c0_i32_1 = arith.constant 0 : i32
    return %c0_i32, %c0_i32_0 : i32, i32
  }
  func.func @transform_4(%arg0: i32) -> (i32, i32) {
    %c0_i32 = arith.constant 0 : i32
    %c0_i32_0 = arith.constant 0 : i32
    %c0_i32_1 = arith.constant 0 : i32
    return %c0_i32, %c0_i32_0 : i32, i32
  }
  func.func @transform_5(%arg0: i32) -> (i32, i32) {
    %c0_i32 = arith.constant 0 : i32
    %c0_i32_0 = arith.constant 0 : i32
    %c0_i32_1 = arith.constant 0 : i32
    return %c0_i32, %c0_i32_0 : i32, i32
  }
  func.func @transform_6(%arg0: i32) -> (i32, i32) {
    %c0_i32 = arith.constant 0 : i32
    %c0_i32_0 = arith.constant 0 : i32
    %c0_i32_1 = arith.constant 0 : i32
    return %c0_i32, %c0_i32_0 : i32, i32
  }
  func.func @transform_7(%arg0: i32) -> (i32, i32) {
    %c0_i32 = arith.constant 0 : i32
    %c0_i32_0 = arith.constant 0 : i32
    %c0_i32_1 = arith.constant 0 : i32
    return %c0_i32, %c0_i32_0 : i32, i32
  }
  func.func @transform_8(%arg0: i32) -> (i32, i32) {
    %c0_i32 = arith.constant 0 : i32
    %c0_i32_0 = arith.constant 0 : i32
    %c0_i32_1 = arith.constant 0 : i32
    return %c0_i32, %c0_i32_0 : i32, i32
  }
  func.func @transform_9(%arg0: i32) -> (i32, i32) {
    %c0_i32 = arith.constant 0 : i32
    %c0_i32_0 = arith.constant 0 : i32
    return %arg0, %c0_i32 : i32, i32
  }
  func.func @transform_10(%arg0: i32) -> (i32, i32) {
    %c0_i32 = arith.constant 0 : i32
    %c0_i32_0 = arith.constant 0 : i32
    return %arg0, %c0_i32 : i32, i32
  }
}

</mosaic_0001>

<llo_original>
// kernel: tpu_custom_call.1
$region0: #{tpu_custom_call.1}
  #allocation0 [shape = 'u32[]', space=smem, size = 0x4, offset = 0x4, fixed_abs, tag = 'smem constant byte address 0x4 - core index']
  #allocation1 [shape = 'u32[144,128]{1,0:T(1,128)}', space=vmem, size = 0x12000, scoped, tag = 'internal scratch']
  %s0 = inlined_call_operand.vmem [shape: f32[16,6], index: 0, kind: input, shape index: {}]
  %s1 = inlined_call_operand.hbm [shape: f32[152,256], index: 1, kind: input, shape index: {}]
  %s2 = inlined_call_operand.vmem [shape: f32[18,128], index: 2, kind: input, shape index: {}]
  %s3 = inlined_call_operand.vmem [shape: f32[384,128], index: 3, kind: input, shape index: {}]
  %s4 = inlined_call_operand.hbm [shape: f32[128,128], index: 4, kind: input, shape index: {}]
  %s5 = inlined_call_operand.hbm [shape: f32[128,128], index: 5, kind: input, shape index: {}]
  %s6 = inlined_call_operand.hbm [shape: f32[128,256], index: 6, kind: input, shape index: {}]
  %s7 = inlined_call_operand.hbm [shape: f32[6,256], index: 7, kind: input, shape index: {}]
  %s8 = inlined_call_operand.vmem [shape: f32[256,64], index: 8, kind: input, shape index: {}]
  %s9 = inlined_call_operand.hbm [shape: f32[16,256], index: 9, kind: output, shape index: {0}]
  %s10 = inlined_call_operand.hbm [shape: f32[2,128], index: 10, kind: output, shape index: {1}]
  %11 = xla_tuple %s9, %s10
  %s12 = sld [smem:[#allocation0]]
  $region74: #{tpu_custom_call.1} parent=0
    _
  %s14 = ssub.s32 1, %s12
  %s15 = scalar_select 0, %s14, %s12
  $region1: #{tpu_custom_call.1} parent=0
    #allocation2 [shape = 'u8[155648]{0}', space=vmem, size = 0x26000, scoped, tag = 'input window, operand 1, single buffered']
    #allocation3 [shape = 's32[1]{0}', space=sflag, size = 0x4, scoped, tag = 'scoped memory for tpu_custom_call.1']
    #allocation4 [shape = 's32[1]{0}', space=sflag, size = 0x4, scoped, tag = 'scoped memory for tpu_custom_call.1']
    #allocation5 [shape = 'u8[65536]{0}', space=vmem, size = 0x10000, scoped, tag = 'input window, operand 4, single buffered']
    #allocation6 [shape = 's32[1]{0}', space=sflag, size = 0x4, scoped, tag = 'scoped memory for tpu_custom_call.1']
    #allocation7 [shape = 'u8[65536]{0}', space=vmem, size = 0x10000, scoped, tag = 'input window, operand 5, single buffered']
    #allocation8 [shape = 'u8[131072]{0}', space=vmem, size = 0x20000, scoped, tag = 'input window, operand 6, single buffered']
    #allocation9 [shape = 's32[1]{0}', space=sflag, size = 0x4, scoped, tag = 'scoped memory for tpu_custom_call.1']
    #allocation10 [shape = 'u8[8192]{0}', space=vmem, size = 0x2000, scoped, tag = 'input window, operand 7, single buffered']
    #allocation11 [shape = 'u8[16384]{0}', space=vmem, size = 0x4000, scoped, tag = 'output window, operand 0, single buffered']
    #allocation12 [shape = 'u8[1024]{0}', space=vmem, size = 0x400, scoped, tag = 'output window, operand 1, single buffered']
    #allocation13 [shape = 's32[1]{0}', space=sflag, size = 0x4, scoped, tag = 'scoped memory for tpu_custom_call.1']
    %16 = vsyncpa [#allocation3], 0
    %17 = vsyncpa [#allocation6], 0
    %18 = vsyncpa [#allocation9], 0
    %19 = vsyncpa [#allocation4], 0
    %20 = vsyncpa [#allocation13], 0
    // Predicated region
    $region2: #{tpu_custom_call.1} parent=1 // pred_check
      _
    $region3: #{tpu_custom_call.1} parent=1 // pred_check_branch
      %22 = sbr.rel (0) target = $region5
    $region4: #{tpu_custom_call.1} parent=1 // pred_region
      _
    $region5: #{tpu_custom_call.1} parent=1 // pred_fallthru
      _
    // Predicated region
    $region6: #{tpu_custom_call.1} parent=1 // pred_check
      _
    $region7: #{tpu_custom_call.1} parent=1 // pred_check_branch
      %24 = sbr.rel (0) target = $region9
    $region8: #{tpu_custom_call.1} parent=1 // pred_region
      %s26 = ssub.s32 4864, 4864
      %27 = vsyncadd [#allocation3], %s26
      %s28 = sshll.u32 [#allocation2], 4
      %s29 = int_to_ptr.vmem [resolvable:$true] %s28
      %34 = dma.hbm_to_vmem [thread:$0]  %s1, 4864, %s29, [#allocation3], 256, 256, 16
    $region9: #{tpu_custom_call.1} parent=1 // pred_fallthru
      _
    // Predicated region
    $region10: #{tpu_custom_call.1} parent=1 // pred_check
      _
    $region11: #{tpu_custom_call.1} parent=1 // pred_check_branch
      %36 = sbr.rel (0) target = $region13
    $region12: #{tpu_custom_call.1} parent=1 // pred_region
      _
    $region13: #{tpu_custom_call.1} parent=1 // pred_fallthru
      _
    // Predicated region
    $region14: #{tpu_custom_call.1} parent=1 // pred_check
      _
    $region15: #{tpu_custom_call.1} parent=1 // pred_check_branch
      %38 = sbr.rel (0) target = $region17
    $region16: #{tpu_custom_call.1} parent=1 // pred_region
      _
    $region17: #{tpu_custom_call.1} parent=1 // pred_fallthru
      _
    // Predicated region
    $region18: #{tpu_custom_call.1} parent=1 // pred_check
      _
    $region19: #{tpu_custom_call.1} parent=1 // pred_check_branch
      %40 = sbr.rel (0) target = $region21
    $region20: #{tpu_custom_call.1} parent=1 // pred_region
      %s42 = ssub.s32 2048, 2048
      %43 = vsyncadd [#allocation6], %s42
      %s44 = sshll.u32 [#allocation5], 4
      %s45 = int_to_ptr.vmem [resolvable:$true] %s44
      %50 = dma.hbm_to_vmem [thread:$0]  %s4, 2048, %s45, [#allocation6], 128, 128, 8
    $region21: #{tpu_custom_call.1} parent=1 // pred_fallthru
      _
    // Predicated region
    $region22: #{tpu_custom_call.1} parent=1 // pred_check
      _
    $region23: #{tpu_custom_call.1} parent=1 // pred_check_branch
      %52 = sbr.rel (0) target = $region25
    $region24: #{tpu_custom_call.1} parent=1 // pred_region
      %s54 = ssub.s32 2048, 2048
      %55 = vsyncadd [#allocation6], %s54
      %s56 = sshll.u32 [#allocation7], 4
      %s57 = int_to_ptr.vmem [resolvable:$true] %s56
      %62 = dma.hbm_to_vmem [thread:$0]  %s5, 2048, %s57, [#allocation6], 128, 128, 8
    $region25: #{tpu_custom_call.1} parent=1 // pred_fallthru
      _
    // Predicated region
    $region26: #{tpu_custom_call.1} parent=1 // pred_check
      _
    $region27: #{tpu_custom_call.1} parent=1 // pred_check_branch
      %64 = sbr.rel (0) target = $region29
    $region28: #{tpu_custom_call.1} parent=1 // pred_region
      %s66 = ssub.s32 4096, 4096
      %67 = vsyncadd [#allocation9], %s66
      %s68 = sshll.u32 [#allocation8], 4
      %s69 = int_to_ptr.vmem [resolvable:$true] %s68
      %74 = dma.hbm_to_vmem [thread:$0]  %s6, 4096, %s69, [#allocation9], 256, 256, 16
    $region29: #{tpu_custom_call.1} parent=1 // pred_fallthru
      _
    // Predicated region
    $region30: #{tpu_custom_call.1} parent=1 // pred_check
      _
    $region31: #{tpu_custom_call.1} parent=1 // pred_check_branch
      %76 = sbr.rel (0) target = $region33
    $region32: #{tpu_custom_call.1} parent=1 // pred_region
      %s78 = ssub.s32 256, 256
      %79 = vsyncadd [#allocation9], %s78
      %s81 = sshll.u32 [#allocation10], 4
      %s82 = int_to_ptr.vmem [resolvable:$true] %s81
      %84 = dma.hbm_to_vmem [thread:$0]  %s7, 256, %s82, [#allocation9]
    $region33: #{tpu_custom_call.1} parent=1 // pred_fallthru
      _
    // Predicated region
    $region34: #{tpu_custom_call.1} parent=1 // pred_check
      _
    $region35: #{tpu_custom_call.1} parent=1 // pred_check_branch
      %86 = sbr.rel (0) target = $region37
    $region36: #{tpu_custom_call.1} parent=1 // pred_region
      _
    $region37: #{tpu_custom_call.1} parent=1 // pred_fallthru
      _
    // Predicated region
    $region38: #{tpu_custom_call.1} parent=1 // pred_check
      _
    $region39: #{tpu_custom_call.1} parent=1 // pred_check_branch
      %88 = sbr.rel (0) target = $region41
    $region40: #{tpu_custom_call.1} parent=1 // pred_region
      %89 = dma.done [#allocation3], 4864
    $region41: #{tpu_custom_call.1} parent=1 // pred_fallthru
      _
    // Predicated region
    $region42: #{tpu_custom_call.1} parent=1 // pred_check
      _
    $region43: #{tpu_custom_call.1} parent=1 // pred_check_branch
      %91 = sbr.rel (0) target = $region45
    $region44: #{tpu_custom_call.1} parent=1 // pred_region
      %92 = dma.done [#allocation6], 2048
    $region45: #{tpu_custom_call.1} parent=1 // pred_fallthru
      _
    // Predicated region
    $region46: #{tpu_custom_call.1} parent=1 // pred_check
      _
    $region47: #{tpu_custom_call.1} parent=1 // pred_check_branch
      %94 = sbr.rel (0) target = $region49
    $region48: #{tpu_custom_call.1} parent=1 // pred_region
      %95 = dma.done [#allocation6], 2048
    $region49: #{tpu_custom_call.1} parent=1 // pred_fallthru
      _
    // Predicated region
    $region50: #{tpu_custom_call.1} parent=1 // pred_check
      _
    $region51: #{tpu_custom_call.1} parent=1 // pred_check_branch
      %97 = sbr.rel (0) target = $region53
    $region52: #{tpu_custom_call.1} parent=1 // pred_region
      %98 = dma.done [#allocation9], 4096
    $region53: #{tpu_custom_call.1} parent=1 // pred_fallthru
      _
    // Predicated region
    $region54: #{tpu_custom_call.1} parent=1 // pred_check
      _
    $region55: #{tpu_custom_call.1} parent=1 // pred_check_branch
      %100 = sbr.rel (0) target = $region57
    $region56: #{tpu_custom_call.1} parent=1 // pred_region
      %101 = dma.done [#allocation9], 256
    $region57: #{tpu_custom_call.1} parent=1 // pred_fallthru
      _
    %v102 = vld [vmem:[%s0] sm:$0xff]
    %v103 = vld [vmem:[%s0 + $0x8] sm:$0xff]
    %v104 = vld [vmem:[#allocation2] ss:$0 sm:$0xff]
    %v105 = vld [vmem:[#allocation2 + $0x1] ss:$0 sm:$0xff]
    %v106 = vld [vmem:[#allocation2 + $0x2] ss:$0 sm:$0xff]
    %v107 = vld [vmem:[#allocation2 + $0x3] ss:$0 sm:$0xff]
    %v108 = vld [vmem:[#allocation2 + $0x4] ss:$0 sm:$0xff]
    %v109 = vld [vmem:[#allocation2 + $0x5] ss:$0 sm:$0xff]
    %v110 = vld [vmem:[#allocation2 + $0x6] ss:$0 sm:$0xff]
    %v111 = vld [vmem:[#allocation2 + $0x7] ss:$0 sm:$0xff]
    %v112 = vld [vmem:[#allocation2 + $0x10] ss:$0 sm:$0xff]
    %s113 = scalar_lea.vmem [#allocation2], 17
    %v114 = vld [vmem:[%s113] ss:$8 sm:$0x3]
    %s115 = scalar_lea.vmem [#allocation2], 18
    %v116 = vld [vmem:[%s115] ss:$8 sm:$0x3]
    %v117 = vld [vmem:[#allocation2 + $0x13] ss:$0 sm:$0xff]
    %v118 = vld [vmem:[#allocation2 + $0x14] ss:$0 sm:$0xff]
    %v119 = vld [vmem:[#allocation2 + $0x20] sm:$0x7]
    %v120 = vld [vmem:[#allocation2 + $0x30] sm:$0xff]
    %v121 = vld [vmem:[#allocation2 + $0x40] sm:$0xff]
    %v122 = vld [vmem:[#allocation2 + $0x50] sm:$0xff]
    %v123 = vld [vmem:[#allocation2 + $0x60] sm:$0xff]
    %v124 = vld [vmem:[#allocation2 + $0x70] sm:$0xff]
    %v125 = vld [vmem:[#allocation2 + $0x80] sm:$0xff]
    %v126 = vld [vmem:[#allocation2 + $0x90] sm:$0xff]
    %v127 = vld [vmem:[#allocation2 + $0xa0] sm:$0xff]
    %v128 = vld [vmem:[#allocation2 + $0xb0] sm:$0xff]
    %v129 = vld [vmem:[#allocation2 + $0xc0] sm:$0xff]
    %v130 = vld [vmem:[#allocation2 + $0xd0] sm:$0xff]
    %v131 = vld [vmem:[#allocation2 + $0xe0] sm:$0xff]
    %v132 = vld [vmem:[#allocation2 + $0xf0] sm:$0xff]
    %v133 = vld [vmem:[#allocation2 + $0x100] sm:$0xff]
    %v134 = vld [vmem:[#allocation2 + $0x110] sm:$0xff]
    %v135 = vld [vmem:[#allocation2 + $0x120] sm:$0xff]
    %vm136 = vcmask 48128
    %v137 = vsel %vm136, %v102, 0.0
    %v138 = vrot.slane %v137, 4
    %v139 = vadd.f32 %v137, %v138
    %v140 = vrot.slane %v139, 2
    %v141 = vadd.f32 %v139, %v140
    %v142 = vrot.slane %v141, 1
    %v143 = vadd.f32 %v141, %v142
    %v144 = vsel %vm136, %v103, 0.0
    %v145 = vrot.slane %v144, 4
    %v146 = vadd.f32 %v144, %v145
    %v147 = vrot.slane %v146, 2
    %v148 = vadd.f32 %v146, %v147
    %v149 = vrot.slane %v148, 1
    %v150 = vadd.f32 %v148, %v149
    %v151 = vrcp.pop 8.0
    %v152 = vmul.f32 %v143, %v151
    %v153 = vmul.f32 %v150, %v151
    %vm156 = vcmask 1041409
    %v157 = vsel %vm156, %v153, %v152
    %vm158 = vcmask 23552
    %v159 = vsel %vm158, %v157, 0
    %vm161 = vcmask 1042432
    %v163 = vsel %vm161, %v119, 0
    %165 = vmatprep.subr.mxu0 0.0
    %166 = vmatpush1.msra.mxu0 0.0
    %167 = vmatprep.subr.mxu0 0.0
    %168 = vmatpush1.msra.mxu0 0.0
    %169 = vmatprep.subr.mxu0 0.0
    %170 = vmatpush1.msra.mxu0 0.0
    %171 = vmatprep.subr.mxu0 0.0
    %172 = vmatpush1.msra.mxu0 0.0
    %173 = vmatprep.subr.mxu0 0.0
    %174 = vmatpush1.msra.mxu0 0.0
    %175 = vmatprep.subr.mxu0 0.0
    %176 = vmatpush1.msra.mxu0 0.0
    %177 = vmatprep.subr.mxu0 0.0
    %178 = vmatpush1.msra.mxu0 0.0
    %179 = vmatprep.subr.mxu0 0.0
    %180 = vmatpush1.msra.mxu0 0.0
    %181 = vmatprep.subr.mxu0 0.0
    %182 = vmatpush1.msra.mxu0 0.0
    %183 = vmatprep.subr.mxu0 0.0
    %184 = vmatpush1.msra.mxu0 0.0
    %185 = vmatprep.subr.mxu0 0.0
    %186 = vmatpush1.msra.mxu0 0.0
    %187 = vmatprep.subr.mxu0 0.0
    %188 = vmatpush1.msra.mxu0 0.0
    %189 = vmatprep.subr.mxu0 0.0
    %190 = vmatpush1.msra.mxu0 0.0
    %191 = vmatprep.subr.mxu0 0.0
    %192 = vmatpush1.msra.mxu0 0.0
    %193 = vmatprep.subr.mxu0 0.0
    %194 = vmatpush1.msra.mxu0 0.0
    %195 = vmatprep.subr.mxu0 0.0
    %196 = vmatpush1.msra.mxu0 %v163
    %197 = vmatprep.subr.mxu0 0.0
    %198 = vmatpush2.msra.mxu0 0.0
    %199 = vmatprep.subr.mxu0 0.0
    %200 = vmatpush2.msra.mxu0 0.0
    %201 = vmatprep.subr.mxu0 0.0
    %202 = vmatpush2.msra.mxu0 0.0
    %203 = vmatprep.subr.mxu0 0.0
    %204 = vmatpush2.msra.mxu0 0.0
    %205 = vmatprep.subr.mxu0 0.0
    %206 = vmatpush2.msra.mxu0 0.0
    %207 = vmatprep.subr.mxu0 0.0
    %208 = vmatpush2.msra.mxu0 0.0
    %209 = vmatprep.subr.mxu0 0.0
    %210 = vmatpush2.msra.mxu0 0.0
    %211 = vmatprep.subr.mxu0 0.0
    %212 = vmatpush2.msra.mxu0 0.0
    %213 = vmatprep.subr.mxu0 0.0
    %214 = vmatpush2.msra.mxu0 0.0
    %215 = vmatprep.subr.mxu0 0.0
    %216 = vmatpush2.msra.mxu0 0.0
    %217 = vmatprep.subr.mxu0 0.0
    %218 = vmatpush2.msra.mxu0 0.0
    %219 = vmatprep.subr.mxu0 0.0
    %220 = vmatpush2.msra.mxu0 0.0
    %221 = vmatprep.subr.mxu0 0.0
    %222 = vmatpush2.msra.mxu0 0.0
    %223 = vmatprep.subr.mxu0 0.0
    %224 = vmatpush2.msra.mxu0 0.0
    %225 = vmatprep.subr.mxu0 0.0
    %226 = vmatpush2.msra.mxu0 0.0
    %227 = vmatprep.subr.mxu0 0.0
    %228 = vmatpush2.msra.mxu0 0.0
    %229 = vmatprep.mubr.f32.mxu0 0.0
    %230 = vmatmul.mubr.f32.gmra.mxu0 %v159
    %v231 = vpop.f32.mrf.mxu0
    %v232 = vadd.f32 %v106, %v231
    %v233 = vpop.f32.mrf.mxu0
    %234 = vdwg.mxu0
    %v235 = vmax.f32 %v232, 0.0
    %vm236 = vcmask 261120
    %v238 = vsel %vm236, %v235, 0
    %240 = vmatprep.subr.mxu0 0.0
    %241 = vmatpush1.msra.mxu0 0.0
    %242 = vmatprep.subr.mxu0 0.0
    %243 = vmatpush1.msra.mxu0 0.0
    %244 = vmatprep.subr.mxu0 0.0
    %245 = vmatpush1.msra.mxu0 0.0
    %246 = vmatprep.subr.mxu0 0.0
    %247 = vmatpush1.msra.mxu0 0.0
    %248 = vmatprep.subr.mxu0 0.0
    %249 = vmatpush1.msra.mxu0 0.0
    %250 = vmatprep.subr.mxu0 0.0
    %251 = vmatpush1.msra.mxu0 0.0
    %252 = vmatprep.subr.mxu0 0.0
    %253 = vmatpush1.msra.mxu0 0.0
    %254 = vmatprep.subr.mxu0 0.0
    %255 = vmatpush1.msra.mxu0 0.0
    %256 = vmatprep.subr.mxu0 0.0
    %257 = vmatpush1.msra.mxu0 0.0
    %258 = vmatprep.subr.mxu0 0.0
    %259 = vmatpush1.msra.mxu0 0.0
    %260 = vmatprep.subr.mxu0 0.0
    %261 = vmatpush1.msra.mxu0 0.0
    %262 = vmatprep.subr.mxu0 0.0
    %263 = vmatpush1.msra.mxu0 0.0
    %264 = vmatprep.subr.mxu0 0.0
    %265 = vmatpush1.msra.mxu0 %v123
    %266 = vmatprep.subr.mxu0 0.0
    %267 = vmatpush1.msra.mxu0 %v122
    %268 = vmatprep.subr.mxu0 0.0
    %269 = vmatpush1.msra.mxu0 %v121
    %270 = vmatprep.subr.mxu0 0.0
    %271 = vmatpush1.msra.mxu0 %v120
    %272 = vmatprep.subr.mxu0 0.0
    %273 = vmatpush2.msra.mxu0 0.0
    %274 = vmatprep.subr.mxu0 0.0
    %275 = vmatpush2.msra.mxu0 0.0
    %276 = vmatprep.subr.mxu0 0.0
    %277 = vmatpush2.msra.mxu0 0.0
    %278 = vmatprep.subr.mxu0 0.0
    %279 = vmatpush2.msra.mxu0 0.0
    %280 = vmatprep.subr.mxu0 0.0
    %281 = vmatpush2.msra.mxu0 0.0
    %282 = vmatprep.subr.mxu0 0.0
    %283 = vmatpush2.msra.mxu0 0.0
    %284 = vmatprep.subr.mxu0 0.0
    %285 = vmatpush2.msra.mxu0 0.0
    %286 = vmatprep.subr.mxu0 0.0
    %287 = vmatpush2.msra.mxu0 0.0
    %288 = vmatprep.subr.mxu0 0.0
    %289 = vmatpush2.msra.mxu0 0.0
    %290 = vmatprep.subr.mxu0 0.0
    %291 = vmatpush2.msra.mxu0 0.0
    %292 = vmatprep.subr.mxu0 0.0
    %293 = vmatpush2.msra.mxu0 0.0
    %294 = vmatprep.subr.mxu0 0.0
    %295 = vmatpush2.msra.mxu0 0.0
    %296 = vmatprep.subr.mxu0 0.0
    %297 = vmatpush2.msra.mxu0 0.0
    %298 = vmatprep.subr.mxu0 0.0
    %299 = vmatpush2.msra.mxu0 0.0
    %300 = vmatprep.subr.mxu0 0.0
    %301 = vmatpush2.msra.mxu0 0.0
    %302 = vmatprep.subr.mxu0 0.0
    %303 = vmatpush2.msra.mxu0 0.0
    %304 = vmatprep.mubr.f32.mxu0 0.0
    %305 = vmatmul.mubr.f32.gmra.mxu0 %v238
    %v306 = vpop.f32.mrf.mxu0
    %v307 = vadd.f32 %v107, %v306
    %v308 = vpop.f32.mrf.mxu0
    %309 = vdwg.mxu0
    %v310 = vmax.f32 %v307, 0.0
    %v312 = vsel %vm236, %v310, 0
    %314 = vmatprep.subr.mxu0 0.0
    %315 = vmatpush1.msra.mxu0 0.0
    %316 = vmatprep.subr.mxu0 0.0
    %317 = vmatpush1.msra.mxu0 0.0
    %318 = vmatprep.subr.mxu0 0.0
    %319 = vmatpush1.msra.mxu0 0.0
    %320 = vmatprep.subr.mxu0 0.0
    %321 = vmatpush1.msra.mxu0 0.0
    %322 = vmatprep.subr.mxu0 0.0
    %323 = vmatpush1.msra.mxu0 0.0
    %324 = vmatprep.subr.mxu0 0.0
    %325 = vmatpush1.msra.mxu0 0.0
    %326 = vmatprep.subr.mxu0 0.0
    %327 = vmatpush1.msra.mxu0 0.0
    %328 = vmatprep.subr.mxu0 0.0
    %329 = vmatpush1.msra.mxu0 0.0
    %330 = vmatprep.subr.mxu0 0.0
    %331 = vmatpush1.msra.mxu0 0.0
    %332 = vmatprep.subr.mxu0 0.0
    %333 = vmatpush1.msra.mxu0 0.0
    %334 = vmatprep.subr.mxu0 0.0
    %335 = vmatpush1.msra.mxu0 0.0
    %336 = vmatprep.subr.mxu0 0.0
    %337 = vmatpush1.msra.mxu0 0.0
    %338 = vmatprep.subr.mxu0 0.0
    %339 = vmatpush1.msra.mxu0 %v127
    %340 = vmatprep.subr.mxu0 0.0
    %341 = vmatpush1.msra.mxu0 %v126
    %342 = vmatprep.subr.mxu0 0.0
    %343 = vmatpush1.msra.mxu0 %v125
    %344 = vmatprep.subr.mxu0 0.0
    %345 = vmatpush1.msra.mxu0 %v124
    %346 = vmatprep.subr.mxu0 0.0
    %347 = vmatpush2.msra.mxu0 0.0
    %348 = vmatprep.subr.mxu0 0.0
    %349 = vmatpush2.msra.mxu0 0.0
    %350 = vmatprep.subr.mxu0 0.0
    %351 = vmatpush2.msra.mxu0 0.0
    %352 = vmatprep.subr.mxu0 0.0
    %353 = vmatpush2.msra.mxu0 0.0
    %354 = vmatprep.subr.mxu0 0.0
    %355 = vmatpush2.msra.mxu0 0.0
    %356 = vmatprep.subr.mxu0 0.0
    %357 = vmatpush2.msra.mxu0 0.0
    %358 = vmatprep.subr.mxu0 0.0
    %359 = vmatpush2.msra.mxu0 0.0
    %360 = vmatprep.subr.mxu0 0.0
    %361 = vmatpush2.msra.mxu0 0.0
    %362 = vmatprep.subr.mxu0 0.0
    %363 = vmatpush2.msra.mxu0 0.0
    %364 = vmatprep.subr.mxu0 0.0
    %365 = vmatpush2.msra.mxu0 0.0
    %366 = vmatprep.subr.mxu0 0.0
    %367 = vmatpush2.msra.mxu0 0.0
    %368 = vmatprep.subr.mxu0 0.0
    %369 = vmatpush2.msra.mxu0 0.0
    %370 = vmatprep.subr.mxu0 0.0
    %371 = vmatpush2.msra.mxu0 0.0
    %372 = vmatprep.subr.mxu0 0.0
    %373 = vmatpush2.msra.mxu0 0.0
    %374 = vmatprep.subr.mxu0 0.0
    %375 = vmatpush2.msra.mxu0 0.0
    %376 = vmatprep.subr.mxu0 0.0
    %377 = vmatpush2.msra.mxu0 0.0
    %378 = vmatprep.mubr.f32.mxu0 0.0
    %379 = vmatmul.mubr.f32.gmra.mxu0 %v312
    %v380 = vpop.f32.mrf.mxu0
    %v381 = vadd.f32 %v108, %v380
    %v382 = vpop.f32.mrf.mxu0
    %383 = vdwg.mxu0
    %v386 = vunpack.c.l.s4 1966171168
    %v387 = vunpack.c.0.s8 %v386
    %v388 = vlaneseq
    %v389 = vshrl.u32 %v388, 7
    %v390 = vsub.s32 %v387, %v389
    %v391 = vrot.slane %v381, %v390
    %v392 = vcombine.high %v391, %v391
    %v394 = vunpack.c.l.s4 1966171168
    %v395 = vunpack.c.0.s8 %v394
    %v396 = vlaneseq
    %v397 = vshrl.u32 %v396, 7
    %v398 = vsub.s32 %v395, %v397
    %v399 = vrot.slane %v391, %v398
    %v401 = vunpack.c.l.s4 1966171168
    %v402 = vunpack.c.0.s8 %v401
    %v403 = vlaneseq
    %v404 = vshrl.u32 %v403, 7
    %v405 = vsub.s32 %v402, %v404
    %v406 = vrot.slane %v392, %v405
    %v407 = vlaneseq
    %v408 = vshrl.u32 %v407, 7
    %v409 = vsub.s32 0, %v408
    %v410 = vrot.slane %v399, %v409
    %v411 = vlaneseq
    %v412 = vshrl.u32 %v411, 7
    %v413 = vsub.s32 0, %v412
    %v414 = vrot.slane %v406, %v413
    %v417 = vsub.f32 %v102, %v410
    %v418 = vsub.f32 %v103, %v414
    %v419 = vsel %vm158, %v417, %v102
    %v420 = vsel %vm158, %v418, %v103
    %v421 = vsel %vm136, %v419, 0.0
    %422 = vadd.xlane.f32.xlu0 %v421
    %v423 = vpop.xlane.xlu0 %422
    %v424 = vsel %vm136, %v420, 0.0
    %425 = vadd.xlane.f32.xlu0 %v424
    %v426 = vpop.xlane.xlu0 %425
    %v427 = vrcp.pop 6.0
    %v428 = vmul.f32 %v423, %v427
    %v429 = vmul.f32 %v426, %v427
    %v430 = vsub.f32 %v419, %v428
    %v431 = vsub.f32 %v420, %v429
    %v432 = vmul.f32 %v430, %v430
    %v433 = vmul.f32 %v431, %v431
    %v434 = vsel %vm136, %v432, 0.0
    %435 = vadd.xlane.f32.xlu0 %v434
    %v436 = vpop.xlane.xlu0 %435
    %v437 = vsel %vm136, %v433, 0.0
    %438 = vadd.xlane.f32.xlu0 %v437
    %v439 = vpop.xlane.xlu0 %438
    %v440 = vmul.f32 %v436, %v427
    %v441 = vmul.f32 %v439, %v427
    %v442 = vadd.f32 %v440, 1e-05
    %v443 = vadd.f32 %v441, 1e-05
    %v444 = vrsqrt.pop %v442
    %v445 = vrsqrt.pop %v443
    %v446 = vmul.f32 %v430, %v444
    %v447 = vmul.f32 %v431, %v445
    %v448 = vmul.f32 %v446, %v104
    %v449 = vmul.f32 %v447, %v104
    %v450 = vadd.f32 %v448, %v105
    %v451 = vadd.f32 %v449, %v105
    %v452 = vlaneseq
    %v453 = vshrl.u32 %v452, 7
    %v454 = vadd.s32 %v453, 8
    %vm455 = vcmp.lt.s32.totalorder %v453, 0
    %v456 = vsub.s32 0, %v453
    %v457 = vsel %vm455, %v456, %v453
    %v458 = vshrl.u32 %v457, 3
    %v459 = vand.u32 %v457, 7
    %v460 = vsub.s32 0, %v459
    %v461 = vsel %vm455, %v460, %v459
    %vm462 = vcmp.lt.s32.totalorder %v454, 0
    %v463 = vsub.s32 0, %v454
    %v464 = vsel %vm462, %v463, %v454
    %v465 = vshrl.u32 %v464, 3
    %v466 = vand.u32 %v464, 7
    %v467 = vsub.s32 0, %v466
    %v468 = vsel %vm462, %v467, %v466
    %vm469 = vcmp.ne.s32.totalorder %v461, 0
    %vm470 = vcmp.ne.s32.totalorder %v468, 0
    %vm471 = vcmp.lt.s32.totalorder %v461, 0
    %vm472 = vcmp.lt.s32.totalorder %v468, 0
    %vm473 = vmand %vm471, %vm469
    %vm474 = vmand %vm472, %vm470
    %v475 = vadd.s32 %v461, 8
    %v476 = vadd.s32 %v468, 8
    %v477 = vsel %vm473, %v475, %v461
    %v478 = vsel %vm474, %v476, %v468
    %vm479 = vcmp.ne.s32.totalorder %v477, 0
    %vm480 = vcmp.ne.s32.totalorder %v478, 0
    %vm481 = vcmp.ne.s32.totalorder %v477, 7
    %vm482 = vcmp.ne.s32.totalorder %v478, 7
    %v483 = vrot.slane %v450, 7
    %v484 = vrot.slane %v451, 7
    %vm485 = vcmp.lt.s32.totalorder %v453, 1
    %v486 = vsel %vm485, %v483, %v484
    %v487 = vsel %vm485, %v484, %v483
    %v488 = vsel %vm479, 1, 0
    %v489 = vsel %vm480, 1, 0
    %vm490 = vcmp.eq.s32.totalorder %v488, 1
    %vm491 = vcmp.eq.s32.totalorder %v489, 1
    %v492 = vsel %vm490, %v487, 0.0
    %v493 = vsel %vm491, %v486, 0.0
    %v494 = vrot.slane %v450, 1
    %v495 = vrot.slane %v451, 1
    %vm496 = vcmp.lt.s32.totalorder %v453, 7
    %v497 = vsel %vm496, %v494, %v495
    %v498 = vsel %vm496, %v495, %v494
    %v499 = vsel %vm481, 1, 0
    %v500 = vsel %vm482, 1, 0
    %vm501 = vcmp.eq.s32.totalorder %v499, 1
    %vm502 = vcmp.eq.s32.totalorder %v500, 1
    %v503 = vsel %vm501, %v497, 0.0
    %v504 = vsel %vm502, %v498, 0.0
    %507 = vrot.lane.b32.xlu0 %v450, 6
    %v508 = vpop.permute.xlu0 %507
    %509 = vrot.lane.b32.xlu0 %v451, 6
    %v510 = vpop.permute.xlu0 %509
    %515 = vrot.lane.b32.xlu0 %v503, 12
    %v516 = vpop.permute.xlu0 %515
    %517 = vrot.lane.b32.xlu0 %v504, 12
    %v518 = vpop.permute.xlu0 %517
    %v521 = vsel %vm136, %v492, %v508
    %v522 = vsel %vm136, %v493, %v510
    %vm523 = vcmask 97280
    %v524 = vsel %vm523, %v521, %v516
    %v525 = vsel %vm523, %v522, %v518
    %v526 = vld [vmem:[%s2] sm:$0xff]
    %v527 = vld [vmem:[%s2 + $0x8] sm:$0xff]
    %v528 = vld [vmem:[%s2 + $0x10] sm:$0x3]
    %vm529 = vcmask 146432
    %v531 = vsel %vm529, %v524, 0
    %v534 = vsel %vm529, %v525, 0
    %vm536 = vcmask 1041408
    %v538 = vsel %vm536, %v528, 0
    %540 = vmatprep.subr.mxu0 0.0
    %541 = vmatpush1.msra.mxu0 0.0
    %542 = vmatprep.subr.mxu0 0.0
    %543 = vmatpush1.msra.mxu0 0.0
    %544 = vmatprep.subr.mxu0 0.0
    %545 = vmatpush1.msra.mxu0 0.0
    %546 = vmatprep.subr.mxu0 0.0
    %547 = vmatpush1.msra.mxu0 0.0
    %548 = vmatprep.subr.mxu0 0.0
    %549 = vmatpush1.msra.mxu0 0.0
    %550 = vmatprep.subr.mxu0 0.0
    %551 = vmatpush1.msra.mxu0 0.0
    %552 = vmatprep.subr.mxu0 0.0
    %553 = vmatpush1.msra.mxu0 0.0
    %554 = vmatprep.subr.mxu0 0.0
    %555 = vmatpush1.msra.mxu0 0.0
    %556 = vmatprep.subr.mxu0 0.0
    %557 = vmatpush1.msra.mxu0 0.0
    %558 = vmatprep.subr.mxu0 0.0
    %559 = vmatpush1.msra.mxu0 0.0
    %560 = vmatprep.subr.mxu0 0.0
    %561 = vmatpush1.msra.mxu0 0.0
    %562 = vmatprep.subr.mxu0 0.0
    %563 = vmatpush1.msra.mxu0 0.0
    %564 = vmatprep.subr.mxu0 0.0
    %565 = vmatpush1.msra.mxu0 0.0
    %566 = vmatprep.subr.mxu0 0.0
    %567 = vmatpush1.msra.mxu0 %v538
    %568 = vmatprep.subr.mxu0 0.0
    %569 = vmatpush1.msra.mxu0 %v527
    %570 = vmatprep.subr.mxu0 0.0
    %571 = vmatpush1.msra.mxu0 %v526
    %572 = vmatprep.subr.mxu0 0.0
    %573 = vmatpush2.msra.mxu0 0.0
    %574 = vmatprep.subr.mxu0 0.0
    %575 = vmatpush2.msra.mxu0 0.0
    %576 = vmatprep.subr.mxu0 0.0
    %577 = vmatpush2.msra.mxu0 0.0
    %578 = vmatprep.subr.mxu0 0.0
    %579 = vmatpush2.msra.mxu0 0.0
    %580 = vmatprep.subr.mxu0 0.0
    %581 = vmatpush2.msra.mxu0 0.0
    %582 = vmatprep.subr.mxu0 0.0
    %583 = vmatpush2.msra.mxu0 0.0
    %584 = vmatprep.subr.mxu0 0.0
    %585 = vmatpush2.msra.mxu0 0.0
    %586 = vmatprep.subr.mxu0 0.0
    %587 = vmatpush2.msra.mxu0 0.0
    %588 = vmatprep.subr.mxu0 0.0
    %589 = vmatpush2.msra.mxu0 0.0
    %590 = vmatprep.subr.mxu0 0.0
    %591 = vmatpush2.msra.mxu0 0.0
    %592 = vmatprep.subr.mxu0 0.0
    %593 = vmatpush2.msra.mxu0 0.0
    %594 = vmatprep.subr.mxu0 0.0
    %595 = vmatpush2.msra.mxu0 0.0
    %596 = vmatprep.subr.mxu0 0.0
    %597 = vmatpush2.msra.mxu0 0.0
    %598 = vmatprep.subr.mxu0 0.0
    %599 = vmatpush2.msra.mxu0 0.0
    %600 = vmatprep.subr.mxu0 0.0
    %601 = vmatpush2.msra.mxu0 0.0
    %602 = vmatprep.subr.mxu0 0.0
    %603 = vmatpush2.msra.mxu0 0.0
    %604 = vmatprep.mubr.f32.mxu0 0.0
    %605 = vmatmul.mubr.f32.gmra.mxu0 %v531
    %v606 = vpop.f32.mrf.mxu0
    %v607 = vadd.f32 %v109, %v606
    %v608 = vpop.f32.mrf.mxu0
    %609 = vmatprep.mubr.f32.mxu0 0.0
    %610 = vmatmul.mubr.f32.gmra.mxu0 %v534
    %v611 = vpop.f32.mrf.mxu0
    %v612 = vadd.f32 %v109, %v611
    %v613 = vpop.f32.mrf.mxu0
    %614 = vdwg.mxu0
    %v615 = vmax.f32 %v607, 0.0
    %v616 = vmax.f32 %v612, 0.0
    %v617 = vrot.slane %v615, 7
    %v618 = vrot.slane %v616, 7
    %v619 = vsel %vm485, %v617, %v618
    %v620 = vsel %vm485, %v618, %v617
    %v621 = vsel %vm490, %v620, 0.0
    %v622 = vsel %vm491, %v619, 0.0
    %v623 = vrot.slane %v615, 1
    %v624 = vrot.slane %v616, 1
    %v625 = vsel %vm496, %v623, %v624
    %v626 = vsel %vm496, %v624, %v623
    %v627 = vsel %vm501, %v625, 0.0
    %v628 = vsel %vm502, %v626, 0.0
    %v629 = vld [vmem:[%s3] sm:$0xff]
    %v630 = vld [vmem:[%s3 + $0x8] sm:$0xff]
    %v631 = vld [vmem:[%s3 + $0x10] sm:$0xff]
    %v632 = vld [vmem:[%s3 + $0x18] sm:$0xff]
    %v633 = vld [vmem:[%s3 + $0x20] sm:$0xff]
    %v634 = vld [vmem:[%s3 + $0x28] sm:$0xff]
    %v635 = vld [vmem:[%s3 + $0x30] sm:$0xff]
    %v636 = vld [vmem:[%s3 + $0x38] sm:$0xff]
    %v637 = vld [vmem:[%s3 + $0x40] sm:$0xff]
    %v638 = vld [vmem:[%s3 + $0x48] sm:$0xff]
    %v639 = vld [vmem:[%s3 + $0x50] sm:$0xff]
    %v640 = vld [vmem:[%s3 + $0x58] sm:$0xff]
    %v641 = vld [vmem:[%s3 + $0x60] sm:$0xff]
    %v642 = vld [vmem:[%s3 + $0x68] sm:$0xff]
    %v643 = vld [vmem:[%s3 + $0x70] sm:$0xff]
    %v644 = vld [vmem:[%s3 + $0x78] sm:$0xff]
    %v645 = vld [vmem:[%s3 + $0x80] sm:$0xff]
    %v646 = vld [vmem:[%s3 + $0x88] sm:$0xff]
    %v647 = vld [vmem:[%s3 + $0x90] sm:$0xff]
    %v648 = vld [vmem:[%s3 + $0x98] sm:$0xff]
    %v649 = vld [vmem:[%s3 + $0xa0] sm:$0xff]
    %v650 = vld [vmem:[%s3 + $0xa8] sm:$0xff]
    %v651 = vld [vmem:[%s3 + $0xb0] sm:$0xff]
    %v652 = vld [vmem:[%s3 + $0xb8] sm:$0xff]
    %v653 = vld [vmem:[%s3 + $0xc0] sm:$0xff]
    %v654 = vld [vmem:[%s3 + $0xc8] sm:$0xff]
    %v655 = vld [vmem:[%s3 + $0xd0] sm:$0xff]
    %v656 = vld [vmem:[%s3 + $0xd8] sm:$0xff]
    %v657 = vld [vmem:[%s3 + $0xe0] sm:$0xff]
    %v658 = vld [vmem:[%s3 + $0xe8] sm:$0xff]
    %v659 = vld [vmem:[%s3 + $0xf0] sm:$0xff]
    %v660 = vld [vmem:[%s3 + $0xf8] sm:$0xff]
    %v661 = vld [vmem:[%s3 + $0x100] sm:$0xff]
    %v662 = vld [vmem:[%s3 + $0x108] sm:$0xff]
    %v663 = vld [vmem:[%s3 + $0x110] sm:$0xff]
    %v664 = vld [vmem:[%s3 + $0x118] sm:$0xff]
    %v665 = vld [vmem:[%s3 + $0x120] sm:$0xff]
    %v666 = vld [vmem:[%s3 + $0x128] sm:$0xff]
    %v667 = vld [vmem:[%s3 + $0x130] sm:$0xff]
    %v668 = vld [vmem:[%s3 + $0x138] sm:$0xff]
    %v669 = vld [vmem:[%s3 + $0x140] sm:$0xff]
    %v670 = vld [vmem:[%s3 + $0x148] sm:$0xff]
    %v671 = vld [vmem:[%s3 + $0x150] sm:$0xff]
    %v672 = vld [vmem:[%s3 + $0x158] sm:$0xff]
    %v673 = vld [vmem:[%s3 + $0x160] sm:$0xff]
    %v674 = vld [vmem:[%s3 + $0x168] sm:$0xff]
    %v675 = vld [vmem:[%s3 + $0x170] sm:$0xff]
    %v676 = vld [vmem:[%s3 + $0x178] sm:$0xff]
    %677 = vmatprep.subr.mxu0 0.0
    %678 = vmatpush1.msra.mxu0 %v644
    %679 = vmatprep.subr.mxu0 0.0
    %680 = vmatpush1.msra.mxu0 %v643
    %681 = vmatprep.subr.mxu0 0.0
    %682 = vmatpush1.msra.mxu0 %v642
    %683 = vmatprep.subr.mxu0 0.0
    %684 = vmatpush1.msra.mxu0 %v641
    %685 = vmatprep.subr.mxu0 0.0
    %686 = vmatpush1.msra.mxu0 %v640
    %687 = vmatprep.subr.mxu0 0.0
    %688 = vmatpush1.msra.mxu0 %v639
    %689 = vmatprep.subr.mxu0 0.0
    %690 = vmatpush1.msra.mxu0 %v638
    %691 = vmatprep.subr.mxu0 0.0
    %692 = vmatpush1.msra.mxu0 %v637
    %693 = vmatprep.subr.mxu0 0.0
    %694 = vmatpush1.msra.mxu0 %v636
    %695 = vmatprep.subr.mxu0 0.0
    %696 = vmatpush1.msra.mxu0 %v635
    %697 = vmatprep.subr.mxu0 0.0
    %698 = vmatpush1.msra.mxu0 %v634
    %699 = vmatprep.subr.mxu0 0.0
    %700 = vmatpush1.msra.mxu0 %v633
    %701 = vmatprep.subr.mxu0 0.0
    %702 = vmatpush1.msra.mxu0 %v632
    %703 = vmatprep.subr.mxu0 0.0
    %704 = vmatpush1.msra.mxu0 %v631
    %705 = vmatprep.subr.mxu0 0.0
    %706 = vmatpush1.msra.mxu0 %v630
    %707 = vmatprep.subr.mxu0 0.0
    %708 = vmatpush1.msra.mxu0 %v629
    %709 = vmatprep.subr.mxu0 0.0
    %710 = vmatpush2.msra.mxu0 %v660
    %711 = vmatprep.subr.mxu0 0.0
    %712 = vmatpush2.msra.mxu0 %v659
    %713 = vmatprep.subr.mxu0 0.0
    %714 = vmatpush2.msra.mxu0 %v658
    %715 = vmatprep.subr.mxu0 0.0
    %716 = vmatpush2.msra.mxu0 %v657
    %717 = vmatprep.subr.mxu0 0.0
    %718 = vmatpush2.msra.mxu0 %v656
    %719 = vmatprep.subr.mxu0 0.0
    %720 = vmatpush2.msra.mxu0 %v655
    %721 = vmatprep.subr.mxu0 0.0
    %722 = vmatpush2.msra.mxu0 %v654
    %723 = vmatprep.subr.mxu0 0.0
    %724 = vmatpush2.msra.mxu0 %v653
    %725 = vmatprep.subr.mxu0 0.0
    %726 = vmatpush2.msra.mxu0 %v652
    %727 = vmatprep.subr.mxu0 0.0
    %728 = vmatpush2.msra.mxu0 %v651
    %729 = vmatprep.subr.mxu0 0.0
    %730 = vmatpush2.msra.mxu0 %v650
    %731 = vmatprep.subr.mxu0 0.0
    %732 = vmatpush2.msra.mxu0 %v649
    %733 = vmatprep.subr.mxu0 0.0
    %734 = vmatpush2.msra.mxu0 %v648
    %735 = vmatprep.subr.mxu0 0.0
    %736 = vmatpush2.msra.mxu0 %v647
    %737 = vmatprep.subr.mxu0 0.0
    %738 = vmatpush2.msra.mxu0 %v646
    %739 = vmatprep.subr.mxu0 0.0
    %740 = vmatpush2.msra.mxu0 %v645
    %741 = vmatprep.mubr.f32.mxu0 %v615
    %742 = vmatmul.mubr.f32.gmra.mxu0 %v621
    %v743 = vpop.f32.mrf.mxu0
    %v744 = vadd.f32 %v110, %v743
    %v745 = vpop.f32.mrf.mxu0
    %746 = vmatprep.mubr.f32.mxu0 %v616
    %747 = vmatmul.mubr.f32.gmra.mxu0 %v622
    %v748 = vpop.f32.mrf.mxu0
    %v749 = vadd.f32 %v110, %v748
    %v750 = vpop.f32.mrf.mxu0
    %751 = vdwg.mxu0
    %752 = vmatprep.subr.mxu0 0.0
    %753 = vmatpush1.msra.mxu0 %v676
    %754 = vmatprep.subr.mxu0 0.0
    %755 = vmatpush1.msra.mxu0 %v675
    %756 = vmatprep.subr.mxu0 0.0
    %757 = vmatpush1.msra.mxu0 %v674
    %758 = vmatprep.subr.mxu0 0.0
    %759 = vmatpush1.msra.mxu0 %v673
    %760 = vmatprep.subr.mxu0 0.0
    %761 = vmatpush1.msra.mxu0 %v672
    %762 = vmatprep.subr.mxu0 0.0
    %763 = vmatpush1.msra.mxu0 %v671
    %764 = vmatprep.subr.mxu0 0.0
    %765 = vmatpush1.msra.mxu0 %v670
    %766 = vmatprep.subr.mxu0 0.0
    %767 = vmatpush1.msra.mxu0 %v669
    %768 = vmatprep.subr.mxu0 0.0
    %769 = vmatpush1.msra.mxu0 %v668
    %770 = vmatprep.subr.mxu0 0.0
    %771 = vmatpush1.msra.mxu0 %v667
    %772 = vmatprep.subr.mxu0 0.0
    %773 = vmatpush1.msra.mxu0 %v666
    %774 = vmatprep.subr.mxu0 0.0
    %775 = vmatpush1.msra.mxu0 %v665
    %776 = vmatprep.subr.mxu0 0.0
    %777 = vmatpush1.msra.mxu0 %v664
    %778 = vmatprep.subr.mxu0 0.0
    %779 = vmatpush1.msra.mxu0 %v663
    %780 = vmatprep.subr.mxu0 0.0
    %781 = vmatpush1.msra.mxu0 %v662
    %782 = vmatprep.subr.mxu0 0.0
    %783 = vmatpush1.msra.mxu0 %v661
    %784 = vmatprep.subr.mxu0 0.0
    %785 = vmatpush2.msra.mxu0 0.0
    %786 = vmatprep.subr.mxu0 0.0
    %787 = vmatpush2.msra.mxu0 0.0
    %788 = vmatprep.subr.mxu0 0.0
    %789 = vmatpush2.msra.mxu0 0.0
    %790 = vmatprep.subr.mxu0 0.0
    %791 = vmatpush2.msra.mxu0 0.0
    %792 = vmatprep.subr.mxu0 0.0
    %793 = vmatpush2.msra.mxu0 0.0
    %794 = vmatprep.subr.mxu0 0.0
    %795 = vmatpush2.msra.mxu0 0.0
    %796 = vmatprep.subr.mxu0 0.0
    %797 = vmatpush2.msra.mxu0 0.0
    %798 = vmatprep.subr.mxu0 0.0
    %799 = vmatpush2.msra.mxu0 0.0
    %800 = vmatprep.subr.mxu0 0.0
    %801 = vmatpush2.msra.mxu0 0.0
    %802 = vmatprep.subr.mxu0 0.0
    %803 = vmatpush2.msra.mxu0 0.0
    %804 = vmatprep.subr.mxu0 0.0
    %805 = vmatpush2.msra.mxu0 0.0
    %806 = vmatprep.subr.mxu0 0.0
    %807 = vmatpush2.msra.mxu0 0.0
    %808 = vmatprep.subr.mxu0 0.0
    %809 = vmatpush2.msra.mxu0 0.0
    %810 = vmatprep.subr.mxu0 0.0
    %811 = vmatpush2.msra.mxu0 0.0
    %812 = vmatprep.subr.mxu0 0.0
    %813 = vmatpush2.msra.mxu0 0.0
    %814 = vmatprep.subr.mxu0 0.0
    %815 = vmatpush2.msra.mxu0 0.0
    %816 = vmatprep.mubr.f32.mxu0 0.0
    %817 = vmatmul.mubr.f32.gmra.mxu0 %v627
    %v818 = vpop.f32.mrf.mxu0
    %v819 = vadd.f32 %v744, %v818
    %v820 = vpop.f32.mrf.mxu0
    %821 = vmatprep.mubr.f32.mxu0 0.0
    %822 = vmatmul.mubr.f32.gmra.mxu0 %v628
    %v823 = vpop.f32.mrf.mxu0
    %v824 = vadd.f32 %v749, %v823
    %v825 = vpop.f32.mrf.mxu0
    %826 = vdwg.mxu0
    %v827 = vmax.f32 %v819, 0.0
    %v828 = vmax.f32 %v824, 0.0
    %v829 = vld [vmem:[#allocation5] sm:$0xff]
    %v830 = vld [vmem:[#allocation5 + $0x8] sm:$0xff]
    %v831 = vld [vmem:[#allocation5 + $0x10] sm:$0xff]
    %v832 = vld [vmem:[#allocation5 + $0x18] sm:$0xff]
    %v833 = vld [vmem:[#allocation5 + $0x20] sm:$0xff]
    %v834 = vld [vmem:[#allocation5 + $0x28] sm:$0xff]
    %v835 = vld [vmem:[#allocation5 + $0x30] sm:$0xff]
    %v836 = vld [vmem:[#allocation5 + $0x38] sm:$0xff]
    %v837 = vld [vmem:[#allocation5 + $0x40] sm:$0xff]
    %v838 = vld [vmem:[#allocation5 + $0x48] sm:$0xff]
    %v839 = vld [vmem:[#allocation5 + $0x50] sm:$0xff]
    %v840 = vld [vmem:[#allocation5 + $0x58] sm:$0xff]
    %v841 = vld [vmem:[#allocation5 + $0x60] sm:$0xff]
    %v842 = vld [vmem:[#allocation5 + $0x68] sm:$0xff]
    %v843 = vld [vmem:[#allocation5 + $0x70] sm:$0xff]
    %v844 = vld [vmem:[#allocation5 + $0x78] sm:$0xff]
    %845 = vmatprep.subr.mxu0 0.0
    %846 = vmatpush1.msra.mxu0 %v844
    %847 = vmatprep.subr.mxu0 0.0
    %848 = vmatpush1.msra.mxu0 %v843
    %849 = vmatprep.subr.mxu0 0.0
    %850 = vmatpush1.msra.mxu0 %v842
    %851 = vmatprep.subr.mxu0 0.0
    %852 = vmatpush1.msra.mxu0 %v841
    %853 = vmatprep.subr.mxu0 0.0
    %854 = vmatpush1.msra.mxu0 %v840
    %855 = vmatprep.subr.mxu0 0.0
    %856 = vmatpush1.msra.mxu0 %v839
    %857 = vmatprep.subr.mxu0 0.0
    %858 = vmatpush1.msra.mxu0 %v838
    %859 = vmatprep.subr.mxu0 0.0
    %860 = vmatpush1.msra.mxu0 %v837
    %861 = vmatprep.subr.mxu0 0.0
    %862 = vmatpush1.msra.mxu0 %v836
    %863 = vmatprep.subr.mxu0 0.0
    %864 = vmatpush1.msra.mxu0 %v835
    %865 = vmatprep.subr.mxu0 0.0
    %866 = vmatpush1.msra.mxu0 %v834
    %867 = vmatprep.subr.mxu0 0.0
    %868 = vmatpush1.msra.mxu0 %v833
    %869 = vmatprep.subr.mxu0 0.0
    %870 = vmatpush1.msra.mxu0 %v832
    %871 = vmatprep.subr.mxu0 0.0
    %872 = vmatpush1.msra.mxu0 %v831
    %873 = vmatprep.subr.mxu0 0.0
    %874 = vmatpush1.msra.mxu0 %v830
    %875 = vmatprep.subr.mxu0 0.0
    %876 = vmatpush1.msra.mxu0 %v829
    %877 = vmatprep.subr.mxu0 0.0
    %878 = vmatpush2.msra.mxu0 0.0
    %879 = vmatprep.subr.mxu0 0.0
    %880 = vmatpush2.msra.mxu0 0.0
    %881 = vmatprep.subr.mxu0 0.0
    %882 = vmatpush2.msra.mxu0 0.0
    %883 = vmatprep.subr.mxu0 0.0
    %884 = vmatpush2.msra.mxu0 0.0
    %885 = vmatprep.subr.mxu0 0.0
    %886 = vmatpush2.msra.mxu0 0.0
    %887 = vmatprep.subr.mxu0 0.0
    %888 = vmatpush2.msra.mxu0 0.0
    %889 = vmatprep.subr.mxu0 0.0
    %890 = vmatpush2.msra.mxu0 0.0
    %891 = vmatprep.subr.mxu0 0.0
    %892 = vmatpush2.msra.mxu0 0.0
    %893 = vmatprep.subr.mxu0 0.0
    %894 = vmatpush2.msra.mxu0 0.0
    %895 = vmatprep.subr.mxu0 0.0
    %896 = vmatpush2.msra.mxu0 0.0
    %897 = vmatprep.subr.mxu0 0.0
    %898 = vmatpush2.msra.mxu0 0.0
    %899 = vmatprep.subr.mxu0 0.0
    %900 = vmatpush2.msra.mxu0 0.0
    %901 = vmatprep.subr.mxu0 0.0
    %902 = vmatpush2.msra.mxu0 0.0
    %903 = vmatprep.subr.mxu0 0.0
    %904 = vmatpush2.msra.mxu0 0.0
    %905 = vmatprep.subr.mxu0 0.0
    %906 = vmatpush2.msra.mxu0 0.0
    %907 = vmatprep.subr.mxu0 0.0
    %908 = vmatpush2.msra.mxu0 0.0
    %909 = vmatprep.mubr.f32.mxu0 0.0
    %910 = vmatmul.mubr.f32.gmra.mxu0 %v827
    %v911 = vpop.f32.mrf.mxu0
    %v912 = vadd.f32 %v111, %v911
    %v913 = vpop.f32.mrf.mxu0
    %914 = vmatprep.mubr.f32.mxu0 0.0
    %915 = vmatmul.mubr.f32.gmra.mxu0 %v828
    %v916 = vpop.f32.mrf.mxu0
    %v917 = vadd.f32 %v111, %v916
    %v918 = vpop.f32.mrf.mxu0
    %919 = vdwg.mxu0
    %v920 = vmax.f32 %v912, 0.0
    %v921 = vmax.f32 %v917, 0.0
    %v922 = vld [vmem:[#allocation7] sm:$0xff]
    %v923 = vld [vmem:[#allocation7 + $0x8] sm:$0xff]
    %v924 = vld [vmem:[#allocation7 + $0x10] sm:$0xff]
    %v925 = vld [vmem:[#allocation7 + $0x18] sm:$0xff]
    %v926 = vld [vmem:[#allocation7 + $0x20] sm:$0xff]
    %v927 = vld [vmem:[#allocation7 + $0x28] sm:$0xff]
    %v928 = vld [vmem:[#allocation7 + $0x30] sm:$0xff]
    %v929 = vld [vmem:[#allocation7 + $0x38] sm:$0xff]
    %v930 = vld [vmem:[#allocation7 + $0x40] sm:$0xff]
    %v931 = vld [vmem:[#allocation7 + $0x48] sm:$0xff]
    %v932 = vld [vmem:[#allocation7 + $0x50] sm:$0xff]
    %v933 = vld [vmem:[#allocation7 + $0x58] sm:$0xff]
    %v934 = vld [vmem:[#allocation7 + $0x60] sm:$0xff]
    %v935 = vld [vmem:[#allocation7 + $0x68] sm:$0xff]
    %v936 = vld [vmem:[#allocation7 + $0x70] sm:$0xff]
    %v937 = vld [vmem:[#allocation7 + $0x78] sm:$0xff]
    %938 = vmatprep.subr.mxu0 0.0
    %939 = vmatpush1.msra.mxu0 %v937
    %940 = vmatprep.subr.mxu0 0.0
    %941 = vmatpush1.msra.mxu0 %v936
    %942 = vmatprep.subr.mxu0 0.0
    %943 = vmatpush1.msra.mxu0 %v935
    %944 = vmatprep.subr.mxu0 0.0
    %945 = vmatpush1.msra.mxu0 %v934
    %946 = vmatprep.subr.mxu0 0.0
    %947 = vmatpush1.msra.mxu0 %v933
    %948 = vmatprep.subr.mxu0 0.0
    %949 = vmatpush1.msra.mxu0 %v932
    %950 = vmatprep.subr.mxu0 0.0
    %951 = vmatpush1.msra.mxu0 %v931
    %952 = vmatprep.subr.mxu0 0.0
    %953 = vmatpush1.msra.mxu0 %v930
    %954 = vmatprep.subr.mxu0 0.0
    %955 = vmatpush1.msra.mxu0 %v929
    %956 = vmatprep.subr.mxu0 0.0
    %957 = vmatpush1.msra.mxu0 %v928
    %958 = vmatprep.subr.mxu0 0.0
    %959 = vmatpush1.msra.mxu0 %v927
    %960 = vmatprep.subr.mxu0 0.0
    %961 = vmatpush1.msra.mxu0 %v926
    %962 = vmatprep.subr.mxu0 0.0
    %963 = vmatpush1.msra.mxu0 %v925
    %964 = vmatprep.subr.mxu0 0.0
    %965 = vmatpush1.msra.mxu0 %v924
    %966 = vmatprep.subr.mxu0 0.0
    %967 = vmatpush1.msra.mxu0 %v923
    %968 = vmatprep.subr.mxu0 0.0
    %969 = vmatpush1.msra.mxu0 %v922
    %970 = vmatprep.subr.mxu0 0.0
    %971 = vmatpush2.msra.mxu0 0.0
    %972 = vmatprep.subr.mxu0 0.0
    %973 = vmatpush2.msra.mxu0 0.0
    %974 = vmatprep.subr.mxu0 0.0
    %975 = vmatpush2.msra.mxu0 0.0
    %976 = vmatprep.subr.mxu0 0.0
    %977 = vmatpush2.msra.mxu0 0.0
    %978 = vmatprep.subr.mxu0 0.0
    %979 = vmatpush2.msra.mxu0 0.0
    %980 = vmatprep.subr.mxu0 0.0
    %981 = vmatpush2.msra.mxu0 0.0
    %982 = vmatprep.subr.mxu0 0.0
    %983 = vmatpush2.msra.mxu0 0.0
    %984 = vmatprep.subr.mxu0 0.0
    %985 = vmatpush2.msra.mxu0 0.0
    %986 = vmatprep.subr.mxu0 0.0
    %987 = vmatpush2.msra.mxu0 0.0
    %988 = vmatprep.subr.mxu0 0.0
    %989 = vmatpush2.msra.mxu0 0.0
    %990 = vmatprep.subr.mxu0 0.0
    %991 = vmatpush2.msra.mxu0 0.0
    %992 = vmatprep.subr.mxu0 0.0
    %993 = vmatpush2.msra.mxu0 0.0
    %994 = vmatprep.subr.mxu0 0.0
    %995 = vmatpush2.msra.mxu0 0.0
    %996 = vmatprep.subr.mxu0 0.0
    %997 = vmatpush2.msra.mxu0 0.0
    %998 = vmatprep.subr.mxu0 0.0
    %999 = vmatpush2.msra.mxu0 0.0
    %1000 = vmatprep.subr.mxu0 0.0
    %1001 = vmatpush2.msra.mxu0 0.0
    %1002 = vmatprep.mubr.f32.mxu0 0.0
    %1003 = vmatmul.mubr.f32.gmra.mxu0 %v920
    %v1004 = vpop.f32.mrf.mxu0
    %v1005 = vadd.f32 %v112, %v1004
    %v1006 = vpop.f32.mrf.mxu0
    %1007 = vmatprep.mubr.f32.mxu0 0.0
    %1008 = vmatmul.mubr.f32.gmra.mxu0 %v921
    %v1009 = vpop.f32.mrf.mxu0
    %v1010 = vadd.f32 %v112, %v1009
    %v1011 = vpop.f32.mrf.mxu0
    %1012 = vdwg.mxu0
    %v1013 = vmax.f32 %v1005, 0.0
    %v1014 = vmax.f32 %v1010, 0.0
    %v1015 = vld [vmem:[#allocation8] sm:$0xff]
    %v1016 = vld [vmem:[#allocation8 + $0x8] sm:$0xff]
    %v1017 = vld [vmem:[#allocation8 + $0x10] sm:$0xff]
    %v1018 = vld [vmem:[#allocation8 + $0x18] sm:$0xff]
    %v1019 = vld [vmem:[#allocation8 + $0x20] sm:$0xff]
    %v1020 = vld [vmem:[#allocation8 + $0x28] sm:$0xff]
    %v1021 = vld [vmem:[#allocation8 + $0x30] sm:$0xff]
    %v1022 = vld [vmem:[#allocation8 + $0x38] sm:$0xff]
    %v1023 = vld [vmem:[#allocation8 + $0x40] sm:$0xff]
    %v1024 = vld [vmem:[#allocation8 + $0x48] sm:$0xff]
    %v1025 = vld [vmem:[#allocation8 + $0x50] sm:$0xff]
    %v1026 = vld [vmem:[#allocation8 + $0x58] sm:$0xff]
    %v1027 = vld [vmem:[#allocation8 + $0x60] sm:$0xff]
    %v1028 = vld [vmem:[#allocation8 + $0x68] sm:$0xff]
    %v1029 = vld [vmem:[#allocation8 + $0x70] sm:$0xff]
    %v1030 = vld [vmem:[#allocation8 + $0x78] sm:$0xff]
    %v1031 = vld [vmem:[#allocation8 + $0x80] sm:$0xff]
    %v1032 = vld [vmem:[#allocation8 + $0x88] sm:$0xff]
    %v1033 = vld [vmem:[#allocation8 + $0x90] sm:$0xff]
    %v1034 = vld [vmem:[#allocation8 + $0x98] sm:$0xff]
    %v1035 = vld [vmem:[#allocation8 + $0xa0] sm:$0xff]
    %v1036 = vld [vmem:[#allocation8 + $0xa8] sm:$0xff]
    %v1037 = vld [vmem:[#allocation8 + $0xb0] sm:$0xff]
    %v1038 = vld [vmem:[#allocation8 + $0xb8] sm:$0xff]
    %v1039 = vld [vmem:[#allocation8 + $0xc0] sm:$0xff]
    %v1040 = vld [vmem:[#allocation8 + $0xc8] sm:$0xff]
    %v1041 = vld [vmem:[#allocation8 + $0xd0] sm:$0xff]
    %v1042 = vld [vmem:[#allocation8 + $0xd8] sm:$0xff]
    %v1043 = vld [vmem:[#allocation8 + $0xe0] sm:$0xff]
    %v1044 = vld [vmem:[#allocation8 + $0xe8] sm:$0xff]
    %v1045 = vld [vmem:[#allocation8 + $0xf0] sm:$0xff]
    %v1046 = vld [vmem:[#allocation8 + $0xf8] sm:$0xff]
    %v1048 = vlaneseq
    %v1049 = vshrl.u32 %v1048, 7
    %v1050 = vsub.s32 0, %v1049
    %v1051 = vrot.slane %v114, %v1050
    %v1052 = vlaneseq
    %v1053 = vshrl.u32 %v1052, 7
    %v1054 = vsub.s32 1, %v1053
    %v1055 = vrot.slane %v114, %v1054
    %1058 = vmatprep.subr.mxu0 %v1046
    %1059 = vmatpush1.msra.mxu0 %v1045
    %1060 = vmatprep.subr.mxu0 %v1044
    %1061 = vmatpush1.msra.mxu0 %v1043
    %1062 = vmatprep.subr.mxu0 %v1042
    %1063 = vmatpush1.msra.mxu0 %v1041
    %1064 = vmatprep.subr.mxu0 %v1040
    %1065 = vmatpush1.msra.mxu0 %v1039
    %1066 = vmatprep.subr.mxu0 %v1038
    %1067 = vmatpush1.msra.mxu0 %v1037
    %1068 = vmatprep.subr.mxu0 %v1036
    %1069 = vmatpush1.msra.mxu0 %v1035
    %1070 = vmatprep.subr.mxu0 %v1034
    %1071 = vmatpush1.msra.mxu0 %v1033
    %1072 = vmatprep.subr.mxu0 %v1032
    %1073 = vmatpush1.msra.mxu0 %v1031
    %1074 = vmatprep.subr.mxu0 %v1030
    %1075 = vmatpush1.msra.mxu0 %v1029
    %1076 = vmatprep.subr.mxu0 %v1028
    %1077 = vmatpush1.msra.mxu0 %v1027
    %1078 = vmatprep.subr.mxu0 %v1026
    %1079 = vmatpush1.msra.mxu0 %v1025
    %1080 = vmatprep.subr.mxu0 %v1024
    %1081 = vmatpush1.msra.mxu0 %v1023
    %1082 = vmatprep.subr.mxu0 %v1022
    %1083 = vmatpush1.msra.mxu0 %v1021
    %1084 = vmatprep.subr.mxu0 %v1020
    %1085 = vmatpush1.msra.mxu0 %v1019
    %1086 = vmatprep.subr.mxu0 %v1018
    %1087 = vmatpush1.msra.mxu0 %v1017
    %1088 = vmatprep.subr.mxu0 %v1016
    %1089 = vmatpush1.msra.mxu0 %v1015
    %1090 = vmatprep.subr.mxu0 0.0
    %1091 = vmatpush2.msra.mxu0 0.0
    %1092 = vmatprep.subr.mxu0 0.0
    %1093 = vmatpush2.msra.mxu0 0.0
    %1094 = vmatprep.subr.mxu0 0.0
    %1095 = vmatpush2.msra.mxu0 0.0
    %1096 = vmatprep.subr.mxu0 0.0
    %1097 = vmatpush2.msra.mxu0 0.0
    %1098 = vmatprep.subr.mxu0 0.0
    %1099 = vmatpush2.msra.mxu0 0.0
    %1100 = vmatprep.subr.mxu0 0.0
    %1101 = vmatpush2.msra.mxu0 0.0
    %1102 = vmatprep.subr.mxu0 0.0
    %1103 = vmatpush2.msra.mxu0 0.0
    %1104 = vmatprep.subr.mxu0 0.0
    %1105 = vmatpush2.msra.mxu0 0.0
    %1106 = vmatprep.subr.mxu0 0.0
    %1107 = vmatpush2.msra.mxu0 0.0
    %1108 = vmatprep.subr.mxu0 0.0
    %1109 = vmatpush2.msra.mxu0 0.0
    %1110 = vmatprep.subr.mxu0 0.0
    %1111 = vmatpush2.msra.mxu0 0.0
    %1112 = vmatprep.subr.mxu0 0.0
    %1113 = vmatpush2.msra.mxu0 0.0
    %1114 = vmatprep.subr.mxu0 0.0
    %1115 = vmatpush2.msra.mxu0 0.0
    %1116 = vmatprep.subr.mxu0 0.0
    %1117 = vmatpush2.msra.mxu0 0.0
    %1118 = vmatprep.subr.mxu0 0.0
    %1119 = vmatpush2.msra.mxu0 0.0
    %1120 = vmatprep.subr.mxu0 0.0
    %1121 = vmatpush2.msra.mxu0 0.0
    %1122 = vmatprep.mubr.f32.mxu0 0.0
    %1123 = vmatmul.mubr.f32.gmra.mxu0 %v1013
    %v1124 = vpop.f32.mrf.mxu0
    %v1125 = vadd.f32 %v1051, %v1124
    %v1126 = vpop.f32.mrf.mxu0
    %v1127 = vadd.f32 %v1055, %v1126
    %1128 = vmatprep.mubr.f32.mxu0 0.0
    %1129 = vmatmul.mubr.f32.gmra.mxu0 %v1014
    %v1130 = vpop.f32.mrf.mxu0
    %v1131 = vadd.f32 %v1051, %v1130
    %v1132 = vpop.f32.mrf.mxu0
    %v1133 = vadd.f32 %v1055, %v1132
    %1134 = vdwg.mxu0
    %v1135 = vmax.f32 %v1125, 0.0
    %v1136 = vmax.f32 %v1127, 0.0
    %v1137 = vmax.f32 %v1131, 0.0
    %v1138 = vmax.f32 %v1133, 0.0
    %v1139 = vld [vmem:[#allocation10] sm:$0x3f]
    %v1140 = vld [vmem:[#allocation10 + $0x8] sm:$0x3f]
    %v1141 = vsel %vm136, %v450, 0
    %v1143 = vsel %vm136, %v451, 0
    %vm1145 = vcmask 1045504
    %v1147 = vsel %vm1145, %v1139, 0
    %v1150 = vsel %vm1145, %v1140, 0
    %1152 = vmatprep.subr.mxu0 0.0
    %1153 = vmatpush1.msra.mxu0 0.0
    %1154 = vmatprep.subr.mxu0 0.0
    %1155 = vmatpush1.msra.mxu0 0.0
    %1156 = vmatprep.subr.mxu0 0.0
    %1157 = vmatpush1.msra.mxu0 0.0
    %1158 = vmatprep.subr.mxu0 0.0
    %1159 = vmatpush1.msra.mxu0 0.0
    %1160 = vmatprep.subr.mxu0 0.0
    %1161 = vmatpush1.msra.mxu0 0.0
    %1162 = vmatprep.subr.mxu0 0.0
    %1163 = vmatpush1.msra.mxu0 0.0
    %1164 = vmatprep.subr.mxu0 0.0
    %1165 = vmatpush1.msra.mxu0 0.0
    %1166 = vmatprep.subr.mxu0 0.0
    %1167 = vmatpush1.msra.mxu0 0.0
    %1168 = vmatprep.subr.mxu0 0.0
    %1169 = vmatpush1.msra.mxu0 0.0
    %1170 = vmatprep.subr.mxu0 0.0
    %1171 = vmatpush1.msra.mxu0 0.0
    %1172 = vmatprep.subr.mxu0 0.0
    %1173 = vmatpush1.msra.mxu0 0.0
    %1174 = vmatprep.subr.mxu0 0.0
    %1175 = vmatpush1.msra.mxu0 0.0
    %1176 = vmatprep.subr.mxu0 0.0
    %1177 = vmatpush1.msra.mxu0 0.0
    %1178 = vmatprep.subr.mxu0 0.0
    %1179 = vmatpush1.msra.mxu0 0.0
    %1180 = vmatprep.subr.mxu0 0.0
    %1181 = vmatpush1.msra.mxu0 0.0
    %1182 = vmatprep.subr.mxu0 %v1150
    %1183 = vmatpush1.msra.mxu0 %v1147
    %1184 = vmatprep.subr.mxu0 0.0
    %1185 = vmatpush2.msra.mxu0 0.0
    %1186 = vmatprep.subr.mxu0 0.0
    %1187 = vmatpush2.msra.mxu0 0.0
    %1188 = vmatprep.subr.mxu0 0.0
    %1189 = vmatpush2.msra.mxu0 0.0
    %1190 = vmatprep.subr.mxu0 0.0
    %1191 = vmatpush2.msra.mxu0 0.0
    %1192 = vmatprep.subr.mxu0 0.0
    %1193 = vmatpush2.msra.mxu0 0.0
    %1194 = vmatprep.subr.mxu0 0.0
    %1195 = vmatpush2.msra.mxu0 0.0
    %1196 = vmatprep.subr.mxu0 0.0
    %1197 = vmatpush2.msra.mxu0 0.0
    %1198 = vmatprep.subr.mxu0 0.0
    %1199 = vmatpush2.msra.mxu0 0.0
    %1200 = vmatprep.subr.mxu0 0.0
    %1201 = vmatpush2.msra.mxu0 0.0
    %1202 = vmatprep.subr.mxu0 0.0
    %1203 = vmatpush2.msra.mxu0 0.0
    %1204 = vmatprep.subr.mxu0 0.0
    %1205 = vmatpush2.msra.mxu0 0.0
    %1206 = vmatprep.subr.mxu0 0.0
    %1207 = vmatpush2.msra.mxu0 0.0
    %1208 = vmatprep.subr.mxu0 0.0
    %1209 = vmatpush2.msra.mxu0 0.0
    %1210 = vmatprep.subr.mxu0 0.0
    %1211 = vmatpush2.msra.mxu0 0.0
    %1212 = vmatprep.subr.mxu0 0.0
    %1213 = vmatpush2.msra.mxu0 0.0
    %1214 = vmatprep.subr.mxu0 0.0
    %1215 = vmatpush2.msra.mxu0 0.0
    %1216 = vmatprep.mubr.f32.mxu0 0.0
    %1217 = vmatmul.mubr.f32.gmra.mxu0 %v1141
    %v1218 = vpop.f32.mrf.mxu0
    %v1219 = vadd.f32 0.0, %v1218
    %v1220 = vpop.f32.mrf.mxu0
    %v1221 = vadd.f32 0.0, %v1220
    %1222 = vmatprep.mubr.f32.mxu0 0.0
    %1223 = vmatmul.mubr.f32.gmra.mxu0 %v1143
    %v1224 = vpop.f32.mrf.mxu0
    %v1225 = vadd.f32 0.0, %v1224
    %v1226 = vpop.f32.mrf.mxu0
    %v1227 = vadd.f32 0.0, %v1226
    %1228 = vdwg.mxu0
    %v1229 = vadd.f32 %v1135, %v1219
    %v1230 = vadd.f32 %v1136, %v1221
    %v1231 = vadd.f32 %v1137, %v1225
    %v1232 = vadd.f32 %v1138, %v1227
    %v1234 = vlaneseq
    %v1235 = vshrl.u32 %v1234, 7
    %v1236 = vsub.s32 0, %v1235
    %v1237 = vrot.slane %v116, %v1236
    %v1238 = vlaneseq
    %v1239 = vshrl.u32 %v1238, 7
    %v1240 = vsub.s32 1, %v1239
    %v1241 = vrot.slane %v116, %v1240
    %v1244 = vadd.f32 %v1229, %v1237
    %v1245 = vadd.f32 %v1230, %v1241
    %v1246 = vadd.f32 %v1231, %v1237
    %v1247 = vadd.f32 %v1232, %v1241
    %1248 = vst [vmem:[#allocation11] sm:$0xff] %v1244
    %1249 = vst [vmem:[#allocation11 + $0x8] sm:$0xff] %v1245
    %1250 = vst [vmem:[#allocation11 + $0x10] sm:$0xff] %v1246
    %1251 = vst [vmem:[#allocation11 + $0x18] sm:$0xff] %v1247
    %v1252 = vrot.slane %v1244, 4
    %v1253 = vadd.f32 %v1244, %v1252
    %v1254 = vrot.slane %v1253, 2
    %v1255 = vadd.f32 %v1253, %v1254
    %v1256 = vrot.slane %v1255, 1
    %v1257 = vadd.f32 %v1255, %v1256
    %v1258 = vrot.slane %v1245, 4
    %v1259 = vadd.f32 %v1245, %v1258
    %v1260 = vrot.slane %v1259, 2
    %v1261 = vadd.f32 %v1259, %v1260
    %v1262 = vrot.slane %v1261, 1
    %v1263 = vadd.f32 %v1261, %v1262
    %v1264 = vrot.slane %v1246, 4
    %v1265 = vadd.f32 %v1246, %v1264
    %v1266 = vrot.slane %v1265, 2
    %v1267 = vadd.f32 %v1265, %v1266
    %v1268 = vrot.slane %v1267, 1
    %v1269 = vadd.f32 %v1267, %v1268
    %v1270 = vrot.slane %v1247, 4
    %v1271 = vadd.f32 %v1247, %v1270
    %v1272 = vrot.slane %v1271, 2
    %v1273 = vadd.f32 %v1271, %v1272
    %v1274 = vrot.slane %v1273, 1
    %v1275 = vadd.f32 %v1273, %v1274
    %v1276 = vmul.f32 %v1257, %v151
    %v1277 = vmul.f32 %v1263, %v151
    %v1278 = vmul.f32 %v1269, %v151
    %v1279 = vmul.f32 %v1275, %v151
    %v1280 = vld [vmem:[%s8] sm:$0xff]
    %v1281 = vld [vmem:[%s8 + $0x8] sm:$0xff]
    %v1282 = vld [vmem:[%s8 + $0x10] sm:$0xff]
    %v1283 = vld [vmem:[%s8 + $0x18] sm:$0xff]
    %v1284 = vld [vmem:[%s8 + $0x20] sm:$0xff]
    %v1285 = vld [vmem:[%s8 + $0x28] sm:$0xff]
    %v1286 = vld [vmem:[%s8 + $0x30] sm:$0xff]
    %v1287 = vld [vmem:[%s8 + $0x38] sm:$0xff]
    %v1288 = vld [vmem:[%s8 + $0x40] sm:$0xff]
    %v1289 = vld [vmem:[%s8 + $0x48] sm:$0xff]
    %v1290 = vld [vmem:[%s8 + $0x50] sm:$0xff]
    %v1291 = vld [vmem:[%s8 + $0x58] sm:$0xff]
    %v1292 = vld [vmem:[%s8 + $0x60] sm:$0xff]
    %v1293 = vld [vmem:[%s8 + $0x68] sm:$0xff]
    %v1294 = vld [vmem:[%s8 + $0x70] sm:$0xff]
    %v1295 = vld [vmem:[%s8 + $0x78] sm:$0xff]
    %v1296 = vld [vmem:[%s8 + $0x80] sm:$0xff]
    %v1297 = vld [vmem:[%s8 + $0x88] sm:$0xff]
    %v1298 = vld [vmem:[%s8 + $0x90] sm:$0xff]
    %v1299 = vld [vmem:[%s8 + $0x98] sm:$0xff]
    %v1300 = vld [vmem:[%s8 + $0xa0] sm:$0xff]
    %v1301 = vld [vmem:[%s8 + $0xa8] sm:$0xff]
    %v1302 = vld [vmem:[%s8 + $0xb0] sm:$0xff]
    %v1303 = vld [vmem:[%s8 + $0xb8] sm:$0xff]
    %v1304 = vld [vmem:[%s8 + $0xc0] sm:$0xff]
    %v1305 = vld [vmem:[%s8 + $0xc8] sm:$0xff]
    %v1306 = vld [vmem:[%s8 + $0xd0] sm:$0xff]
    %v1307 = vld [vmem:[%s8 + $0xd8] sm:$0xff]
    %v1308 = vld [vmem:[%s8 + $0xe0] sm:$0xff]
    %v1309 = vld [vmem:[%s8 + $0xe8] sm:$0xff]
    %v1310 = vld [vmem:[%s8 + $0xf0] sm:$0xff]
    %v1311 = vld [vmem:[%s8 + $0xf8] sm:$0xff]
    %v1316 = vsel %vm156, %v1278, %v1276
    %v1317 = vsel %vm156, %v1279, %v1277
    %1320 = vmatprep.subr.mxu0 0.0
    %1321 = vmatpush1.msra.mxu0 %v1295
    %1322 = vmatprep.subr.mxu0 0.0
    %1323 = vmatpush1.msra.mxu0 %v1294
    %1324 = vmatprep.subr.mxu0 0.0
    %1325 = vmatpush1.msra.mxu0 %v1293
    %1326 = vmatprep.subr.mxu0 0.0
    %1327 = vmatpush1.msra.mxu0 %v1292
    %1328 = vmatprep.subr.mxu0 0.0
    %1329 = vmatpush1.msra.mxu0 %v1291
    %1330 = vmatprep.subr.mxu0 0.0
    %1331 = vmatpush1.msra.mxu0 %v1290
    %1332 = vmatprep.subr.mxu0 0.0
    %1333 = vmatpush1.msra.mxu0 %v1289
    %1334 = vmatprep.subr.mxu0 0.0
    %1335 = vmatpush1.msra.mxu0 %v1288
    %1336 = vmatprep.subr.mxu0 0.0
    %1337 = vmatpush1.msra.mxu0 %v1287
    %1338 = vmatprep.subr.mxu0 0.0
    %1339 = vmatpush1.msra.mxu0 %v1286
    %1340 = vmatprep.subr.mxu0 0.0
    %1341 = vmatpush1.msra.mxu0 %v1285
    %1342 = vmatprep.subr.mxu0 0.0
    %1343 = vmatpush1.msra.mxu0 %v1284
    %1344 = vmatprep.subr.mxu0 0.0
    %1345 = vmatpush1.msra.mxu0 %v1283
    %1346 = vmatprep.subr.mxu0 0.0
    %1347 = vmatpush1.msra.mxu0 %v1282
    %1348 = vmatprep.subr.mxu0 0.0
    %1349 = vmatpush1.msra.mxu0 %v1281
    %1350 = vmatprep.subr.mxu0 0.0
    %1351 = vmatpush1.msra.mxu0 %v1280
    %1352 = vmatprep.subr.mxu0 0.0
    %1353 = vmatpush2.msra.mxu0 %v1311
    %1354 = vmatprep.subr.mxu0 0.0
    %1355 = vmatpush2.msra.mxu0 %v1310
    %1356 = vmatprep.subr.mxu0 0.0
    %1357 = vmatpush2.msra.mxu0 %v1309
    %1358 = vmatprep.subr.mxu0 0.0
    %1359 = vmatpush2.msra.mxu0 %v1308
    %1360 = vmatprep.subr.mxu0 0.0
    %1361 = vmatpush2.msra.mxu0 %v1307
    %1362 = vmatprep.subr.mxu0 0.0
    %1363 = vmatpush2.msra.mxu0 %v1306
    %1364 = vmatprep.subr.mxu0 0.0
    %1365 = vmatpush2.msra.mxu0 %v1305
    %1366 = vmatprep.subr.mxu0 0.0
    %1367 = vmatpush2.msra.mxu0 %v1304
    %1368 = vmatprep.subr.mxu0 0.0
    %1369 = vmatpush2.msra.mxu0 %v1303
    %1370 = vmatprep.subr.mxu0 0.0
    %1371 = vmatpush2.msra.mxu0 %v1302
    %1372 = vmatprep.subr.mxu0 0.0
    %1373 = vmatpush2.msra.mxu0 %v1301
    %1374 = vmatprep.subr.mxu0 0.0
    %1375 = vmatpush2.msra.mxu0 %v1300
    %1376 = vmatprep.subr.mxu0 0.0
    %1377 = vmatpush2.msra.mxu0 %v1299
    %1378 = vmatprep.subr.mxu0 0.0
    %1379 = vmatpush2.msra.mxu0 %v1298
    %1380 = vmatprep.subr.mxu0 0.0
    %1381 = vmatpush2.msra.mxu0 %v1297
    %1382 = vmatprep.subr.mxu0 0.0
    %1383 = vmatpush2.msra.mxu0 %v1296
    %1384 = vmatprep.mubr.f32.mxu0 %v1317
    %1385 = vmatmul.mubr.f32.gmra.mxu0 %v1316
    %v1386 = vpop.f32.mrf.mxu0
    %v1387 = vadd.f32 %v117, %v1386
    %v1388 = vpop.f32.mrf.mxu0
    %1389 = vdwg.mxu0
    %v1390 = vmax.f32 %v1387, 0.0
    %vm1391 = vcmask 523264
    %v1393 = vsel %vm1391, %v1390, 0
    %1395 = vmatprep.subr.mxu0 0.0
    %1396 = vmatpush1.msra.mxu0 0.0
    %1397 = vmatprep.subr.mxu0 0.0
    %1398 = vmatpush1.msra.mxu0 0.0
    %1399 = vmatprep.subr.mxu0 0.0
    %1400 = vmatpush1.msra.mxu0 0.0
    %1401 = vmatprep.subr.mxu0 0.0
    %1402 = vmatpush1.msra.mxu0 0.0
    %1403 = vmatprep.subr.mxu0 0.0
    %1404 = vmatpush1.msra.mxu0 0.0
    %1405 = vmatprep.subr.mxu0 0.0
    %1406 = vmatpush1.msra.mxu0 0.0
    %1407 = vmatprep.subr.mxu0 0.0
    %1408 = vmatpush1.msra.mxu0 0.0
    %1409 = vmatprep.subr.mxu0 0.0
    %1410 = vmatpush1.msra.mxu0 0.0
    %1411 = vmatprep.subr.mxu0 0.0
    %1412 = vmatpush1.msra.mxu0 %v135
    %1413 = vmatprep.subr.mxu0 0.0
    %1414 = vmatpush1.msra.mxu0 %v134
    %1415 = vmatprep.subr.mxu0 0.0
    %1416 = vmatpush1.msra.mxu0 %v133
    %1417 = vmatprep.subr.mxu0 0.0
    %1418 = vmatpush1.msra.mxu0 %v132
    %1419 = vmatprep.subr.mxu0 0.0
    %1420 = vmatpush1.msra.mxu0 %v131
    %1421 = vmatprep.subr.mxu0 0.0
    %1422 = vmatpush1.msra.mxu0 %v130
    %1423 = vmatprep.subr.mxu0 0.0
    %1424 = vmatpush1.msra.mxu0 %v129
    %1425 = vmatprep.subr.mxu0 0.0
    %1426 = vmatpush1.msra.mxu0 %v128
    %1427 = vmatprep.subr.mxu0 0.0
    %1428 = vmatpush2.msra.mxu0 0.0
    %1429 = vmatprep.subr.mxu0 0.0
    %1430 = vmatpush2.msra.mxu0 0.0
    %1431 = vmatprep.subr.mxu0 0.0
    %1432 = vmatpush2.msra.mxu0 0.0
    %1433 = vmatprep.subr.mxu0 0.0
    %1434 = vmatpush2.msra.mxu0 0.0
    %1435 = vmatprep.subr.mxu0 0.0
    %1436 = vmatpush2.msra.mxu0 0.0
    %1437 = vmatprep.subr.mxu0 0.0
    %1438 = vmatpush2.msra.mxu0 0.0
    %1439 = vmatprep.subr.mxu0 0.0
    %1440 = vmatpush2.msra.mxu0 0.0
    %1441 = vmatprep.subr.mxu0 0.0
    %1442 = vmatpush2.msra.mxu0 0.0
    %1443 = vmatprep.subr.mxu0 0.0
    %1444 = vmatpush2.msra.mxu0 0.0
    %1445 = vmatprep.subr.mxu0 0.0
    %1446 = vmatpush2.msra.mxu0 0.0
    %1447 = vmatprep.subr.mxu0 0.0
    %1448 = vmatpush2.msra.mxu0 0.0
    %1449 = vmatprep.subr.mxu0 0.0
    %1450 = vmatpush2.msra.mxu0 0.0
    %1451 = vmatprep.subr.mxu0 0.0
    %1452 = vmatpush2.msra.mxu0 0.0
    %1453 = vmatprep.subr.mxu0 0.0
    %1454 = vmatpush2.msra.mxu0 0.0
    %1455 = vmatprep.subr.mxu0 0.0
    %1456 = vmatpush2.msra.mxu0 0.0
    %1457 = vmatprep.subr.mxu0 0.0
    %1458 = vmatpush2.msra.mxu0 0.0
    %1459 = vmatprep.mubr.f32.mxu0 0.0
    %1460 = vmatmul.mubr.f32.gmra.mxu0 %v1393
    %v1461 = vpop.f32.mrf.mxu0
    %v1462 = vadd.f32 %v118, %v1461
    %v1463 = vpop.f32.mrf.mxu0
    %1464 = vdwg.mxu0
    %vm1465 = vcmask 25600
    %v1466 = vsel %vm1465, %v1462, -inf
    %1467 = vmax.xlane.f32.xlu0 %v1466
    %v1468 = vpop.xlane.xlu0 %1467
    %v1469 = vsub.f32 %v1462, %v1468
    %v1470 = vmul.f32 %v1469, 1.442695
    %v1471 = vpow.pop %v1470
    %v1472 = vsel %vm1465, %v1471, 0.0
    %1473 = vadd.xlane.f32.xlu0 %v1472
    %v1474 = vpop.xlane.xlu0 %1473
    %v1475 = vrcp.pop %v1474
    %v1476 = vmul.f32 %v1471, %v1475
    %1478 = vrot.lane.b32.xlu0 %v1476, 3
    %v1479 = vpop.permute.xlu0 %1478
    %v1481 = vsel %vm158, %v381, %v1479
    %vm1482 = vcmask 56320
    %v1483 = vsel %vm1482, %v1481, 0.0
    %1484 = vst [vmem:[#allocation12] sm:$0x3] %v1483
    // Predicated region
    $region58: #{tpu_custom_call.1} parent=1 // pred_check
      _
    $region59: #{tpu_custom_call.1} parent=1 // pred_check_branch
      %1486 = sbr.rel (0) target = $region61
    $region60: #{tpu_custom_call.1} parent=1 // pred_region
      %s1488 = ssub.s32 512, 512
      %1489 = vsyncadd [#allocation4], %s1488
      %s1490 = sshll.u32 [#allocation11], 4
      %s1491 = int_to_ptr.vmem [resolvable:$true] %s1490
      %1496 = dma.vmem_to_hbm [thread:$0]  %s1491, 512, %s9, [#allocation4], 256, 256, 16
    $region61: #{tpu_custom_call.1} parent=1 // pred_fallthru
      _
    // Predicated region
    $region62: #{tpu_custom_call.1} parent=1 // pred_check
      _
    $region63: #{tpu_custom_call.1} parent=1 // pred_check_branch
      %1498 = sbr.rel (0) target = $region65
    $region64: #{tpu_custom_call.1} parent=1 // pred_region
      %s1500 = ssub.s32 32, 32
      %1501 = vsyncadd [#allocation13], %s1500
      %s1503 = sshll.u32 [#allocation12], 4
      %s1504 = int_to_ptr.vmem [resolvable:$true] %s1503
      %1506 = dma.vmem_to_hbm [thread:$0]  %s1504, 32, %s10, [#allocation13]
    $region65: #{tpu_custom_call.1} parent=1 // pred_fallthru
      _
    // Predicated region
    $region66: #{tpu_custom_call.1} parent=1 // pred_check
      _
    $region67: #{tpu_custom_call.1} parent=1 // pred_check_branch
      %1508 = sbr.rel (0) target = $region69
    $region68: #{tpu_custom_call.1} parent=1 // pred_region
      %1509 = dma.done [#allocation4], 512
    $region69: #{tpu_custom_call.1} parent=1 // pred_fallthru
      _
    // Predicated region
    $region70: #{tpu_custom_call.1} parent=1 // pred_check
      _
    $region71: #{tpu_custom_call.1} parent=1 // pred_check_branch
      %1511 = sbr.rel (0) target = $region73
    $region72: #{tpu_custom_call.1} parent=1 // pred_region
      %1512 = dma.done [#allocation13], 32
    $region73: #{tpu_custom_call.1} parent=1 // pred_fallthru
      _
    %1513 = vsyncpa [#allocation3], 1
    %1514 = vsyncpa [#allocation6], 1
    %1515 = vsyncpa [#allocation9], 1
    %1516 = vsyncpa [#allocation4], 1
    %1517 = vsyncpa [#allocation13], 1

</llo_original>
